<compile_context>
chip_gen: v5e
topology: v5e:2x2
jax: 0.10.0
libtpu: 0.0.40
codegen_flags: <defaults>
</compile_context>

<pallas_src>
import jax
import jax.numpy as jnp
from jax.experimental import pallas as pl
from jax.experimental.pallas import tpu as pltpu


def _self_attention_kernel(x_ref, wq_ref, wk_ref, wv_ref, bq_ref, bk_ref,
                           bv_ref, alpha_ref, o_ref, kt_scr, v_scr):
    # x_ref  : (1, C, HW) bf16  per-batch channel-major slab (resident)
    # wq/wk  : (C8, C) bf16 ; wv : (C, C) bf16
    # bq/bk  : (C8, 1) f32  ; bv : (C, 1) f32
    # alpha  : (1, 1)  f32 scalar in SMEM
    # o_ref  : (1, C, TQ) f32 output tile
    # kt_scr : (HW, C8) bf16  persistent per-batch K^T
    # v_scr  : (C, HW)  bf16  persistent per-batch V
    qi = pl.program_id(1)
    tq = o_ref.shape[2]

    # K^T and V once per batch; persist in VMEM scratch across the (innermost,
    # "arbitrary") query-tile axis.  The only transpose in the kernel is this
    # tiny (C8, HW) -> (HW, C8) f32 one, done once per batch on the XLU.
    @pl.when(qi == 0)
    def _():
        x_all = x_ref[0]                                            # (C, HW)
        k = jnp.dot(wk_ref[...], x_all,
                    preferred_element_type=jnp.float32) + bk_ref[...]
        kt_scr[...] = k.T.astype(jnp.bfloat16)                      # (HW, C8)
        v = jnp.dot(wv_ref[...], x_all,
                    preferred_element_type=jnp.float32) + bv_ref[...]
        v_scr[...] = v.astype(jnp.bfloat16)                         # (C, HW)

    start = pl.multiple_of(qi * tq, tq)
    x_t = x_ref[0, :, pl.ds(start, tq)]                             # (C, TQ) bf16

    # Query projection for this pixel tile: (C8, C) @ (C, TQ) — NN, bf16 MXU.
    q = jnp.dot(wq_ref[...], x_t,
                preferred_element_type=jnp.float32) + bq_ref[...]   # (C8, TQ)

    # Scores stored transposed: sT[k_pix, q_pix].  (HW, C8) @ (C8, TQ) — NN.
    s_t = jnp.dot(kt_scr[...], q.astype(jnp.bfloat16),
                  preferred_element_type=jnp.float32)               # (HW, TQ)

    # Numerically stable softmax over keys (axis 0), normalization deferred.
    m = jnp.max(s_t, axis=0, keepdims=True)                         # (1, TQ)
    p_t = jnp.exp(s_t - m)                                          # (HW, TQ)
    denom = jnp.sum(p_t, axis=0, keepdims=True)                     # (1, TQ)

    # Unnormalized attention output: (C, HW) @ (HW, TQ) — NN, bf16 MXU.
    out = jnp.dot(v_scr[...], p_t.astype(jnp.bfloat16),
                  preferred_element_type=jnp.float32)               # (C, TQ)

    # Fused softmax-normalization + residual gate; reciprocal on the EUP slot.
    scale = alpha_ref[0, 0] * pl.reciprocal(denom, approx=True)     # (1, TQ)
    o_ref[0] = scale * out + x_t.astype(jnp.float32)


def _default_q_tile(hw):
    """TQ = 256 on 256-row-MXU chips (v6e / v7x), 128 on 128-row MXUs (<= v5)."""
    try:
        kind = jax.devices()[0].device_kind.lower()
    except Exception:
        kind = ""
    narrow_mxu = any(t in kind for t in ("v2", "v3", "v4", "v5"))
    target = 128 if narrow_mxu else 256
    for cand in (target, 128):
        if hw >= cand and hw % cand == 0:
            return cand
    return hw


def _derive_vmem_limit(C, C8, HW, tq):
    """VMEM budget from the actual buffer set, capped below physical VMEM."""
    def tile_bytes(rows, cols, itemsize):
        r = -(-rows // 8) * 8
        c = -(-cols // 128) * 128
        return r * c * itemsize

    need = 0
    need += 2 * tile_bytes(C, HW, 2)                                 # x slab (x2 bufs)
    need += 2 * (2 * tile_bytes(C8, C, 2) + tile_bytes(C, C, 2))     # Wq/Wk/Wv
    need += 2 * (2 * tile_bytes(C8, 1, 4) + tile_bytes(C, 1, 4))     # biases
    need += 2 * tile_bytes(C, tq, 4)                                 # out tile (x2 bufs)
    need += tile_bytes(HW, C8, 2) + tile_bytes(C, HW, 2)             # K^T / V scratch
    need += 6 * tile_bytes(HW, tq, 4)                                # score/exp temps
    limit = 2 * need + (8 << 20)                                     # 2x margin + slack
    try:
        phys = pltpu.get_tpu_info().vmem_capacity_bytes
    except Exception:
        phys = 64 << 20                                              # v7x worst case
    return int(min(max(limit, 32 << 20), phys - (8 << 20)))


def self_attention(x_nchw, wq, bq, wk, bk, wv, bv, alpha, *, q_tile=None):
    """Fused Pallas forward of SelfAttention.

    x_nchw: (N, C, H, W) float32 (PyTorch layout).
    wq, wk: (C//8, C, 1, 1) 1x1-conv weights; wv: (C, C, 1, 1).
    bq, bk: (C//8,); bv: (C,); alpha: scalar. Returns (N, C, H, W) float32.
    """
    N, C, H, W = x_nchw.shape
    HW = H * W
    C8 = C // 8

    # NCHW -> (N, C, HW) is a pure reshape: no layout transpose, no extra HBM
    # traffic.  Channels sit on sublanes, HW (multiple of 128) on lanes.
    x = x_nchw.reshape(N, C, HW).astype(jnp.bfloat16)

    # 1x1 convs are per-pixel matmuls in (Cout, Cin) orientation; bf16 weights.
    wq_m = wq.reshape(C8, C).astype(jnp.bfloat16)
    wk_m = wk.reshape(C8, C).astype(jnp.bfloat16)
    wv_m = wv.reshape(C, C).astype(jnp.bfloat16)
    bq_r = bq.reshape(C8, 1).astype(jnp.float32)
    bk_r = bk.reshape(C8, 1).astype(jnp.float32)
    bv_r = bv.reshape(C, 1).astype(jnp.float32)
    alpha_r = jnp.asarray(alpha, jnp.float32).reshape(1, 1)

    tq = q_tile if q_tile is not None else _default_q_tile(HW)
    if HW % tq != 0:
        tq = HW                       # fallback: single query tile
    grid = (N, HW // tq)

    cost = pl.CostEstimate(
        flops=int(2 * N * HW * C * (2 * C8 + C) + 2 * N * HW * HW * (C8 + C)),
        transcendentals=int(N * HW * HW),
        bytes_accessed=int(N * C * HW * 2 + N * C * HW * 4
                           + (2 * C8 * C + C * C) * 2 + (2 * C8 + C) * 4 + 4),
    )

    kernel = pl.pallas_call(
        _self_attention_kernel,
        out_shape=jax.ShapeDtypeStruct((N, C, HW), jnp.float32),
        grid_spec=pltpu.PrefetchScalarGridSpec(
            num_scalar_prefetch=0,
            grid=grid,
            in_specs=[
                # Per-batch x slab, resident in VMEM across the query-tile axis.
                pl.BlockSpec((1, C, HW), lambda b, qi: (b, 0, 0)),
                pl.BlockSpec((C8, C), lambda b, qi: (0, 0)),    # Wq
                pl.BlockSpec((C8, C), lambda b, qi: (0, 0)),    # Wk
                pl.BlockSpec((C, C), lambda b, qi: (0, 0)),     # Wv
                pl.BlockSpec((C8, 1), lambda b, qi: (0, 0)),    # bq
                pl.BlockSpec((C8, 1), lambda b, qi: (0, 0)),    # bk
                pl.BlockSpec((C, 1), lambda b, qi: (0, 0)),     # bv
                # Scalar residual gate in SMEM.
                pl.BlockSpec(memory_space=pltpu.MemorySpace.SMEM),
            ],
            out_specs=pl.BlockSpec((1, C, tq), lambda b, qi: (b, 0, qi)),
            scratch_shapes=[
                pltpu.VMEM((HW, C8), jnp.bfloat16),   # K^T (per batch)
                pltpu.VMEM((C, HW), jnp.bfloat16),    # V   (per batch)
            ],
        ),
        compiler_params=pltpu.CompilerParams(
            dimension_semantics=("parallel", "arbitrary"),
            vmem_limit_bytes=_derive_vmem_limit(C, C8, HW, tq),
        ),
        cost_estimate=cost,
    )
    y = kernel(x, wq_m, wk_m, wv_m, bq_r, bk_r, bv_r, alpha_r)
    return y.reshape(N, C, H, W)


def _self_attention_ref(x_nchw, wq, bq, wk, bk, wv, bv, alpha):
    """Pure-JAX f32 reference mirroring the PyTorch forward."""
    N, C, H, W = x_nchw.shape
    HW = H * W
    C8 = C // 8
    xf = x_nchw.reshape(N, C, HW).astype(jnp.float32)
    q = jnp.einsum("oc,ncp->nop", wq.reshape(C8, C), xf) + bq[None, :, None]
    k = jnp.einsum("oc,ncp->nop", wk.reshape(C8, C), xf) + bk[None, :, None]
    v = jnp.einsum("oc,ncp->nop", wv.reshape(C, C), xf) + bv[None, :, None]
    s = jnp.einsum("ncq,nck->nqk", q, k)                 # (N, HWq, HWk)
    attn = jax.nn.softmax(s, axis=-1)
    out = jnp.einsum("nck,nqk->ncq", v, attn)            # (N, C, HWq)
    y = alpha * out + xf
    return y.reshape(N, C, H, W)


if __name__ == "__main__":
    # SelfAttention(in_channels=128) on a (2, 128, 16, 16) NCHW input.
    # in_channels=128 keeps the channel axis a full 128-wide tile and HW=256 a
    # multiple of 128, so every kernel access is lane/sublane aligned.
    N, C, H, W = 2, 128, 16, 16
    C8 = C // 8

    key = jax.random.PRNGKey(0)
    kx, kwq, kbq, kwk, kbk, kwv, kbv = jax.random.split(key, 7)

    def bf16_exact(a):
        # bf16-representable test inputs: the kernel feeds the MXU in bf16, so
        # this isolates kernel error from input-quantization error.
        return a.astype(jnp.bfloat16).astype(jnp.float32)

    bound = float(C) ** -0.5  # PyTorch Conv2d default init bound (fan_in = C)
    x = bf16_exact(jax.random.normal(kx, (N, C, H, W), jnp.float32))
    wq = bf16_exact(jax.random.uniform(kwq, (C8, C, 1, 1), jnp.float32, -bound, bound))
    bq = jax.random.uniform(kbq, (C8,), jnp.float32, -bound, bound)
    wk = bf16_exact(jax.random.uniform(kwk, (C8, C, 1, 1), jnp.float32, -bound, bound))
    bk = jax.random.uniform(kbk, (C8,), jnp.float32, -bound, bound)
    # TODO(synk): the reference module's `self.v` outputs C//8 channels, which
    # makes its `.view(bs, c, h, w)` + residual shape-invalid for every input;
    # we use the standard SAGAN C-channel value projection so the forward is
    # well-defined.
    wv = bf16_exact(jax.random.uniform(kwv, (C, C, 1, 1), jnp.float32, -bound, bound))
    bv = jax.random.uniform(kbv, (C,), jnp.float32, -bound, bound)
    # nn.Parameter(torch.zeros(1)) initializes alpha to 0; use a nonzero value
    # so the attention path actually contributes to the output under test.
    alpha = jnp.float32(0.75)

    out = jax.jit(self_attention)(x, wq, bq, wk, bk, wv, bv, alpha)
    jax.block_until_ready(out)

    ref = _self_attention_ref(x, wq, bq, wk, bk, wv, bv, alpha)
    assert out.shape == (N, C, H, W) and out.dtype == jnp.float32
    max_err = float(jnp.max(jnp.abs(out - ref)))
    # bf16-MXU tolerance vs the f32 reference.
    assert bool(jnp.allclose(out, ref, rtol=2e-2, atol=2e-2)), max_err
    print("KERNEL_OK")
</pallas_src>

<mosaic_0001>
module attributes {stable_mosaic.version = 11 : i64} {
  func.func @_self_attention_kernel(%arg0: i32, %arg1: i32, %arg2: memref<1x128x256xbf16, #tpu.memory_space<vmem>>, %arg3: memref<16x128xbf16, #tpu.memory_space<vmem>>, %arg4: memref<16x128xbf16, #tpu.memory_space<vmem>>, %arg5: memref<128x128xbf16, #tpu.memory_space<vmem>>, %arg6: memref<16x1xf32, #tpu.memory_space<vmem>>, %arg7: memref<16x1xf32, #tpu.memory_space<vmem>>, %arg8: memref<128x1xf32, #tpu.memory_space<vmem>>, %arg9: memref<1x1xf32, #tpu.memory_space<smem>>, %arg10: memref<1x128x256xf32, #tpu.memory_space<vmem>>, %arg11: memref<256x16xbf16, #tpu.memory_space<vmem>>, %arg12: memref<128x256xbf16, #tpu.memory_space<vmem>>) attributes {dimension_semantics = [#tpu.dimension_semantics<parallel>, #tpu.dimension_semantics<arbitrary>], iteration_bounds = array<i64: 2, 1>, scalar_prefetch = 0 : i64, scratch_operands = 2 : i64, tpu.core_type = #tpu.core_type<tc>, window_params = [{transform_indices = @transform_0, window_bounds = array<i64: 1, 128, 256>}, {pipeline_mode = #tpu.pipeline_mode<synchronous>, transform_indices = @transform_1, window_bounds = array<i64: 16, 128>}, {pipeline_mode = #tpu.pipeline_mode<synchronous>, transform_indices = @transform_2, window_bounds = array<i64: 16, 128>}, {pipeline_mode = #tpu.pipeline_mode<synchronous>, transform_indices = @transform_3, window_bounds = array<i64: 128, 128>}, {pipeline_mode = #tpu.pipeline_mode<synchronous>, transform_indices = @transform_4, window_bounds = array<i64: 16, 1>}, {pipeline_mode = #tpu.pipeline_mode<synchronous>, transform_indices = @transform_5, window_bounds = array<i64: 16, 1>}, {pipeline_mode = #tpu.pipeline_mode<synchronous>, transform_indices = @transform_6, window_bounds = array<i64: 128, 1>}, {transform_indices = @transform_7, window_bounds = array<i64: 1, 1>}, {transform_indices = @transform_8, window_bounds = array<i64: 1, 128, 256>}]} {
    %c0_i32 = arith.constant 0 : i32
    %0 = arith.cmpi eq, %arg1, %c0_i32 : i32
    %1 = arith.extui %0 : i1 to i32
    %c0_i32_0 = arith.constant 0 : i32
    %2 = arith.cmpi ne, %1, %c0_i32_0 : i32
    scf.if %2 {
      %c0_19 = arith.constant 0 : index
      %c0_20 = arith.constant 0 : index
      %c0_21 = arith.constant 0 : index
      %37 = vector.load %arg2[%c0_19, %c0_20, %c0_21] : memref<1x128x256xbf16, #tpu.memory_space<vmem>>, vector<1x128x256xbf16>
      %38 = vector.shape_cast %37 : vector<1x128x256xbf16> to vector<128x256xbf16>
      %c0_22 = arith.constant 0 : index
      %c0_23 = arith.constant 0 : index
      %39 = vector.load %arg4[%c0_22, %c0_23] : memref<16x128xbf16, #tpu.memory_space<vmem>>, vector<16x128xbf16>
      %cst_24 = arith.constant dense<0.000000e+00> : vector<16x256xf32>
      %40 = tpu.matmul %39, %38, %cst_24 {dimension_numbers = #tpu.dot_dimension_numbers<[1], [0], [0], [1], [0, 0, 1, 1], [], []>} : vector<16x128xbf16>, vector<128x256xbf16>, vector<16x256xf32> -> vector<16x256xf32>
      %c0_25 = arith.constant 0 : index
      %c0_26 = arith.constant 0 : index
      %41 = vector.load %arg7[%c0_25, %c0_26] : memref<16x1xf32, #tpu.memory_space<vmem>>, vector<16x1xf32>
      %42 = vector.broadcast %41 : vector<16x1xf32> to vector<16x256xf32>
      %43 = arith.addf %40, %42 : vector<16x256xf32>
      %44 = tpu.transpose %43, [1, 0] : vector<16x256xf32> -> vector<256x16xf32>
      %45 = arith.truncf %44 : vector<256x16xf32> to vector<256x16xbf16>
      %c0_27 = arith.constant 0 : index
      %c0_28 = arith.constant 0 : index
      %46 = vector.load %arg11[%c0_27, %c0_28] : memref<256x16xbf16, #tpu.memory_space<vmem>>, vector<256x16xbf16>
      tpu.vector_store %arg11[%c0_27, %c0_28], %45 {strides = array<i32>} : memref<256x16xbf16, #tpu.memory_space<vmem>>, vector<256x16xbf16>,
      %c0_29 = arith.constant 0 : index
      %c0_30 = arith.constant 0 : index
      %47 = vector.load %arg5[%c0_29, %c0_30] : memref<128x128xbf16, #tpu.memory_space<vmem>>, vector<128x128xbf16>
      %cst_31 = arith.constant dense<0.000000e+00> : vector<128x256xf32>
      %48 = tpu.matmul %47, %38, %cst_31 {dimension_numbers = #tpu.dot_dimension_numbers<[1], [0], [0], [1], [0, 0, 1, 1], [], []>} : vector<128x128xbf16>, vector<128x256xbf16>, vector<128x256xf32> -> vector<128x256xf32>
      %c0_32 = arith.constant 0 : index
      %c0_33 = arith.constant 0 : index
      %49 = vector.load %arg8[%c0_32, %c0_33] : memref<128x1xf32, #tpu.memory_space<vmem>>, vector<128x1xf32>
      %50 = vector.broadcast %49 : vector<128x1xf32> to vector<128x256xf32>
      %51 = arith.addf %48, %50 : vector<128x256xf32>
      %52 = arith.truncf %51 : vector<128x256xf32> to vector<128x256xbf16>
      %c0_34 = arith.constant 0 : index
      %c0_35 = arith.constant 0 : index
      %53 = vector.load %arg12[%c0_34, %c0_35] : memref<128x256xbf16, #tpu.memory_space<vmem>>, vector<128x256xbf16>
      tpu.vector_store %arg12[%c0_34, %c0_35], %52 {strides = array<i32>} : memref<128x256xbf16, #tpu.memory_space<vmem>>, vector<128x256xbf16>,
    } else {
    }
    %c256_i32 = arith.constant 256 : i32
    %3 = arith.muli %arg1, %c256_i32 : i32
    %4 = tpu.assume_multiple %3, 256 : i32
    %c0 = arith.constant 0 : index
    %c0_1 = arith.constant 0 : index
    %5 = arith.index_cast %4 : i32 to index
    %6 = vector.load %arg2[%c0, %c0_1, %5] : memref<1x128x256xbf16, #tpu.memory_space<vmem>>, vector<1x128x256xbf16>
    %7 = vector.shape_cast %6 : vector<1x128x256xbf16> to vector<128x256xbf16>
    %c0_2 = arith.constant 0 : index
    %c0_3 = arith.constant 0 : index
    %8 = vector.load %arg3[%c0_2, %c0_3] : memref<16x128xbf16, #tpu.memory_space<vmem>>, vector<16x128xbf16>
    %cst = arith.constant dense<0.000000e+00> : vector<16x256xf32>
    %9 = tpu.matmul %8, %7, %cst {dimension_numbers = #tpu.dot_dimension_numbers<[1], [0], [0], [1], [0, 0, 1, 1], [], []>} : vector<16x128xbf16>, vector<128x256xbf16>, vector<16x256xf32> -> vector<16x256xf32>
    %c0_4 = arith.constant 0 : index
    %c0_5 = arith.constant 0 : index
    %10 = vector.load %arg6[%c0_4, %c0_5] : memref<16x1xf32, #tpu.memory_space<vmem>>, vector<16x1xf32>
    %11 = vector.broadcast %10 : vector<16x1xf32> to vector<16x256xf32>
    %12 = arith.addf %9, %11 : vector<16x256xf32>
    %c0_6 = arith.constant 0 : index
    %c0_7 = arith.constant 0 : index
    %13 = vector.load %arg11[%c0_6, %c0_7] : memref<256x16xbf16, #tpu.memory_space<vmem>>, vector<256x16xbf16>
    %14 = arith.truncf %12 : vector<16x256xf32> to vector<16x256xbf16>
    %cst_8 = arith.constant dense<0.000000e+00> : vector<256x256xf32>
    %15 = tpu.matmul %13, %14, %cst_8 {dimension_numbers = #tpu.dot_dimension_numbers<[1], [0], [0], [1], [0, 0, 1, 1], [], []>} : vector<256x16xbf16>, vector<16x256xbf16>, vector<256x256xf32> -> vector<256x256xf32>
    %cst_9 = arith.constant dense<0xFF800000> : vector<256xf32>
    %16 = vector.multi_reduction <maximumf>, %15, %cst_9 [0] : vector<256x256xf32> to vector<256xf32>
    %17 = vector.shape_cast %16 : vector<256xf32> to vector<1x256xf32>
    %18 = vector.broadcast %17 : vector<1x256xf32> to vector<256x256xf32>
    %19 = arith.subf %15, %18 : vector<256x256xf32>
    %20 = math.exp %19 : vector<256x256xf32>
    %cst_10 = arith.constant dense<0.000000e+00> : vector<256xf32>
    %21 = vector.multi_reduction <add>, %20, %cst_10 [0] : vector<256x256xf32> to vector<256xf32>
    %22 = vector.shape_cast %21 : vector<256xf32> to vector<1x256xf32>
    %c0_11 = arith.constant 0 : index
    %c0_12 = arith.constant 0 : index
    %23 = vector.load %arg12[%c0_11, %c0_12] : memref<128x256xbf16, #tpu.memory_space<vmem>>, vector<128x256xbf16>
    %24 = arith.truncf %20 : vector<256x256xf32> to vector<256x256xbf16>
    %cst_13 = arith.constant dense<0.000000e+00> : vector<128x256xf32>
    %25 = tpu.matmul %23, %24, %cst_13 {dimension_numbers = #tpu.dot_dimension_numbers<[1], [0], [0], [1], [0, 0, 1, 1], [], []>} : vector<128x256xbf16>, vector<256x256xbf16>, vector<128x256xf32> -> vector<128x256xf32>
    %c0_14 = arith.constant 0 : index
    %c0_15 = arith.constant 0 : index
    %26 = memref.load %arg9[%c0_14, %c0_15] : memref<1x1xf32, #tpu.memory_space<smem>>
    %27 = tpu.reciprocal %22 {approx = true} : vector<1x256xf32> -> vector<1x256xf32>
    %28 = vector.broadcast %26 : f32 to vector<1x256xf32>
    %29 = arith.mulf %28, %27 : vector<1x256xf32>
    %30 = vector.broadcast %29 : vector<1x256xf32> to vector<128x256xf32>
    %31 = arith.mulf %30, %25 : vector<128x256xf32>
    %32 = arith.extf %7 : vector<128x256xbf16> to vector<128x256xf32>
    %33 = arith.addf %31, %32 : vector<128x256xf32>
    %c0_16 = arith.constant 0 : index
    %c0_17 = arith.constant 0 : index
    %c0_18 = arith.constant 0 : index
    %34 = vector.load %arg10[%c0_16, %c0_17, %c0_18] : memref<1x128x256xf32, #tpu.memory_space<vmem>>, vector<1x128x256xf32>
    %35 = vector.shape_cast %34 : vector<1x128x256xf32> to vector<128x256xf32>
    %36 = vector.shape_cast %33 : vector<128x256xf32> to vector<1x128x256xf32>
    tpu.vector_store %arg10[%c0_16, %c0_17, %c0_18], %36 {strides = array<i32>} : memref<1x128x256xf32, #tpu.memory_space<vmem>>, vector<1x128x256xf32>,
    return
  }
  func.func @transform_0(%arg0: i32, %arg1: i32) -> (i32, i32, i32) {
    %c0_i32 = arith.constant 0 : i32
    %c0_i32_0 = arith.constant 0 : i32
    %c0_i32_1 = arith.constant 0 : i32
    return %arg0, %c0_i32, %c0_i32_0 : i32, i32, i32
  }
  func.func @transform_1(%arg0: i32, %arg1: i32) -> (i32, i32) {
    %c0_i32 = arith.constant 0 : i32
    %c0_i32_0 = arith.constant 0 : i32
    %c0_i32_1 = arith.constant 0 : i32
    return %c0_i32, %c0_i32_0 : i32, i32
  }
  func.func @transform_2(%arg0: i32, %arg1: i32) -> (i32, i32) {
    %c0_i32 = arith.constant 0 : i32
    %c0_i32_0 = arith.constant 0 : i32
    %c0_i32_1 = arith.constant 0 : i32
    return %c0_i32, %c0_i32_0 : i32, i32
  }
  func.func @transform_3(%arg0: i32, %arg1: i32) -> (i32, i32) {
    %c0_i32 = arith.constant 0 : i32
    %c0_i32_0 = arith.constant 0 : i32
    %c0_i32_1 = arith.constant 0 : i32
    return %c0_i32, %c0_i32_0 : i32, i32
  }
  func.func @transform_4(%arg0: i32, %arg1: i32) -> (i32, i32) {
    %c0_i32 = arith.constant 0 : i32
    %c0_i32_0 = arith.constant 0 : i32
    %c0_i32_1 = arith.constant 0 : i32
    return %c0_i32, %c0_i32_0 : i32, i32
  }
  func.func @transform_5(%arg0: i32, %arg1: i32) -> (i32, i32) {
    %c0_i32 = arith.constant 0 : i32
    %c0_i32_0 = arith.constant 0 : i32
    %c0_i32_1 = arith.constant 0 : i32
    return %c0_i32, %c0_i32_0 : i32, i32
  }
  func.func @transform_6(%arg0: i32, %arg1: i32) -> (i32, i32) {
    %c0_i32 = arith.constant 0 : i32
    %c0_i32_0 = arith.constant 0 : i32
    %c0_i32_1 = arith.constant 0 : i32
    return %c0_i32, %c0_i32_0 : i32, i32
  }
  func.func @transform_7(%arg0: i32, %arg1: i32) -> (i32, i32) {
    %c0_i32 = arith.constant 0 : i32
    %c0_i32_0 = arith.constant 0 : i32
    %c0_i32_1 = arith.constant 0 : i32
    return %c0_i32, %c0_i32_0 : i32, i32
  }
  func.func @transform_8(%arg0: i32, %arg1: i32) -> (i32, i32, i32) {
    %c0_i32 = arith.constant 0 : i32
    %c0_i32_0 = arith.constant 0 : i32
    return %arg0, %c0_i32, %arg1 : i32, i32, i32
  }
}

</mosaic_0001>

<llo_original>
// kernel: self_attention.1
$region0: #{self_attention.1}
  #allocation0 [shape = 'u32[]', space=smem, size = 0x4, offset = 0x4, fixed_abs, tag = 'smem constant byte address 0x4 - core index']
  #allocation1 [shape = 'u32[72,128]{1,0:T(1,128)}', space=vmem, size = 0x9000, scoped, tag = 'internal scratch']
  #allocation2 [shape = 'bf16[256,16]{1,0:T(8,128)(2,1)}', space=vmem, size = 0x10000, scoped, tag = 'scratch operand']
  #allocation3 [shape = 'bf16[128,256]{1,0:T(8,128)(2,1)}', space=vmem, size = 0x10000, scoped, tag = 'scratch operand']
  #allocation4 [shape = 'f32[1,1]{1,0:T(1,128)S(6)}', space=smem, size = 0x200, scoped, tag = 'scoped memory for self_attention.1']
  %s0 = inlined_call_operand.vmem [shape: bf16[2,128,256], index: 0, kind: input, shape index: {}]
  %s1 = inlined_call_operand.vmem [shape: bf16[16,128], index: 1, kind: input, shape index: {}]
  %s2 = inlined_call_operand.vmem [shape: bf16[16,128], index: 2, kind: input, shape index: {}]
  %s3 = inlined_call_operand.vmem [shape: bf16[128,128], index: 3, kind: input, shape index: {}]
  %s4 = inlined_call_operand.vmem [shape: f32[16,1], index: 4, kind: input, shape index: {}]
  %s5 = inlined_call_operand.vmem [shape: f32[16,1], index: 5, kind: input, shape index: {}]
  %s6 = inlined_call_operand.vmem [shape: f32[128,1], index: 6, kind: input, shape index: {}]
  %s7 = inlined_call_operand.<no memory space> [shape: f32[1,1], index: 7, kind: input, shape index: {}]
  %s8 = inlined_call_operand.vmem [shape: f32[2,128,256], index: 8, kind: output, shape index: {}]
  %s9 = sld [smem:[#allocation0]]
  $region69: #{self_attention.1} parent=0
    _
  %s11 = ssub.s32 1, %s9
  %s12 = scalar_select 0, %s11, %s9
  %13 = sst [smem:[#allocation4]] %s7
  loop: start=0, step=1, limit=4
  $region2: #{self_attention.1} parent=0 // loop_pre_header
    _
  $region3: #{self_attention.1} parent=0 // loop_header
    %s15 = sphi 0, %s19
    %p16 = scmp.ge.s32.totalorder %s15, 4
    %s22 = sphi 0, %s34
    %s23 = sphi 0, %s30
    %s24 = sphi 0, %s22
    %s25 = sphi 0, %s23
    %s26 = sphi 0, %s24
    %s27 = sphi 0, %s25
    %s37 = sphi 0, %s39
    %s40 = sphi 0, %s37
    %s41 = sphi 0, %s40
    %s57 = sphi 0, %s41
    %s61 = sphi 0, %s61
    %s63 = sphi 0, %s61
    %s64 = sphi 0, %s63
    %s78 = sphi 0, %s64
    %s82 = sphi 0, %s82
    %s84 = sphi 0, %s82
    %s85 = sphi 0, %s84
    %s99 = sphi 0, %s85
    %s103 = sphi 0, %s103
    %s105 = sphi 0, %s103
    %s106 = sphi 0, %s105
    %s120 = sphi 0, %s106
    %s124 = sphi 0, %s124
    %s126 = sphi 0, %s124
    %s127 = sphi 0, %s126
    %s141 = sphi 0, %s127
    %s145 = sphi 0, %s145
    %s147 = sphi 0, %s145
    %s148 = sphi 0, %s147
    %s162 = sphi 0, %s148
    %s166 = sphi 0, %s166
    %s168 = sphi 0, %s166
    %s169 = sphi 0, %s168
    %s183 = sphi 0, %s169
    %s187 = sphi 0, %s187
    %s189 = sphi 0, %s187
    %s190 = sphi 0, %s189
    %s204 = sphi 0, %s190
    %s212 = sphi 0, %s214
    %s215 = sphi 0, %s212
    %s216 = sphi 0, %s215
    %s232 = sphi 0, %s216
  $region4: #{self_attention.1} parent=0 // loop_header_branch
    %18 = sbr.rel (%p16) target = $region8
  $region5: #{self_attention.1} parent=0 // loop_body
    %s20 = ssub.s32 %s15, 1
    %s21 = ssub.s32 %s15, 2
    %s28 = sadd.s32 1, %s23
    %p29 = scmp.ge.s32.totalorder %s28, 1
    %s30 = scalar_select %p29, 0, %s28
    %s31 = sadd.s32 1, %s22
    %s32 = scalar_select %p29, %s31, %s22
    %p33 = scmp.ge.s32.totalorder %s32, 2
    %s34 = scalar_select %p33, 0, %s32
    %s35 = ssub.s32 %s22, %s34
    %p36 = scmp.eq.s32.totalorder %s35, 0
    %s38 = sadd.s32 %s37, 1
    %s39 = scalar_select %p36, %s37, %s38
    %p42 = pneg %p36
    %p43 = scmp.eq.s32.totalorder %s15, 1
    %p44 = por %p42, %p43
    %p45 = scmp.ne.s32.totalorder %s37, %s40
    %p46 = scmp.eq.s32.totalorder %s15, 0
    %p47 = por %p45, %p46
    %p48 = scmp.ne.s32.totalorder %s37, %s40
    %p49 = scmp.eq.s32.totalorder %s20, 1
    %p50 = por %p48, %p49
    %p51 = scmp.ne.s32.totalorder %s40, %s41
    %p52 = scmp.eq.s32.totalorder %s20, 0
    %p53 = por %p51, %p52
    %p54 = scmp.ne.s32.totalorder %s40, %s41
    %p55 = scmp.eq.s32.totalorder %s21, 1
    %p56 = por %p54, %p55
    %p58 = scmp.ne.s32.totalorder %s41, %s57
    %p59 = scmp.eq.s32.totalorder %s21, 0
    %p60 = por %p58, %p59
    %s62 = sadd.s32 %s61, 1
    %p65 = scmp.eq.s32.totalorder %s15, 1
    %p66 = scmp.ne.s32.totalorder %s61, %s63
    %p67 = scmp.eq.s32.totalorder %s15, 0
    %p68 = por %p66, %p67
    %p69 = scmp.ne.s32.totalorder %s61, %s63
    %p70 = scmp.eq.s32.totalorder %s20, 1
    %p71 = por %p69, %p70
    %p72 = scmp.ne.s32.totalorder %s63, %s64
    %p73 = scmp.eq.s32.totalorder %s20, 0
    %p74 = por %p72, %p73
    %p75 = scmp.ne.s32.totalorder %s63, %s64
    %p76 = scmp.eq.s32.totalorder %s21, 1
    %p77 = por %p75, %p76
    %p79 = scmp.ne.s32.totalorder %s64, %s78
    %p80 = scmp.eq.s32.totalorder %s21, 0
    %p81 = por %p79, %p80
    %s83 = sadd.s32 %s82, 1
    %p86 = scmp.eq.s32.totalorder %s15, 1
    %p87 = scmp.ne.s32.totalorder %s82, %s84
    %p88 = scmp.eq.s32.totalorder %s15, 0
    %p89 = por %p87, %p88
    %p90 = scmp.ne.s32.totalorder %s82, %s84
    %p91 = scmp.eq.s32.totalorder %s20, 1
    %p92 = por %p90, %p91
    %p93 = scmp.ne.s32.totalorder %s84, %s85
    %p94 = scmp.eq.s32.totalorder %s20, 0
    %p95 = por %p93, %p94
    %p96 = scmp.ne.s32.totalorder %s84, %s85
    %p97 = scmp.eq.s32.totalorder %s21, 1
    %p98 = por %p96, %p97
    %p100 = scmp.ne.s32.totalorder %s85, %s99
    %p101 = scmp.eq.s32.totalorder %s21, 0
    %p102 = por %p100, %p101
    %s104 = sadd.s32 %s103, 1
    %p107 = scmp.eq.s32.totalorder %s15, 1
    %p108 = scmp.ne.s32.totalorder %s103, %s105
    %p109 = scmp.eq.s32.totalorder %s15, 0
    %p110 = por %p108, %p109
    %p111 = scmp.ne.s32.totalorder %s103, %s105
    %p112 = scmp.eq.s32.totalorder %s20, 1
    %p113 = por %p111, %p112
    %p114 = scmp.ne.s32.totalorder %s105, %s106
    %p115 = scmp.eq.s32.totalorder %s20, 0
    %p116 = por %p114, %p115
    %p117 = scmp.ne.s32.totalorder %s105, %s106
    %p118 = scmp.eq.s32.totalorder %s21, 1
    %p119 = por %p117, %p118
    %p121 = scmp.ne.s32.totalorder %s106, %s120
    %p122 = scmp.eq.s32.totalorder %s21, 0
    %p123 = por %p121, %p122
    %s125 = sadd.s32 %s124, 1
    %p128 = scmp.eq.s32.totalorder %s15, 1
    %p129 = scmp.ne.s32.totalorder %s124, %s126
    %p130 = scmp.eq.s32.totalorder %s15, 0
    %p131 = por %p129, %p130
    %p132 = scmp.ne.s32.totalorder %s124, %s126
    %p133 = scmp.eq.s32.totalorder %s20, 1
    %p134 = por %p132, %p133
    %p135 = scmp.ne.s32.totalorder %s126, %s127
    %p136 = scmp.eq.s32.totalorder %s20, 0
    %p137 = por %p135, %p136
    %p138 = scmp.ne.s32.totalorder %s126, %s127
    %p139 = scmp.eq.s32.totalorder %s21, 1
    %p140 = por %p138, %p139
    %p142 = scmp.ne.s32.totalorder %s127, %s141
    %p143 = scmp.eq.s32.totalorder %s21, 0
    %p144 = por %p142, %p143
    %s146 = sadd.s32 %s145, 1
    %p149 = scmp.eq.s32.totalorder %s15, 1
    %p150 = scmp.ne.s32.totalorder %s145, %s147
    %p151 = scmp.eq.s32.totalorder %s15, 0
    %p152 = por %p150, %p151
    %p153 = scmp.ne.s32.totalorder %s145, %s147
    %p154 = scmp.eq.s32.totalorder %s20, 1
    %p155 = por %p153, %p154
    %p156 = scmp.ne.s32.totalorder %s147, %s148
    %p157 = scmp.eq.s32.totalorder %s20, 0
    %p158 = por %p156, %p157
    %p159 = scmp.ne.s32.totalorder %s147, %s148
    %p160 = scmp.eq.s32.totalorder %s21, 1
    %p161 = por %p159, %p160
    %p163 = scmp.ne.s32.totalorder %s148, %s162
    %p164 = scmp.eq.s32.totalorder %s21, 0
    %p165 = por %p163, %p164
    %s167 = sadd.s32 %s166, 1
    %p170 = scmp.eq.s32.totalorder %s15, 1
    %p171 = scmp.ne.s32.totalorder %s166, %s168
    %p172 = scmp.eq.s32.totalorder %s15, 0
    %p173 = por %p171, %p172
    %p174 = scmp.ne.s32.totalorder %s166, %s168
    %p175 = scmp.eq.s32.totalorder %s20, 1
    %p176 = por %p174, %p175
    %p177 = scmp.ne.s32.totalorder %s168, %s169
    %p178 = scmp.eq.s32.totalorder %s20, 0
    %p179 = por %p177, %p178
    %p180 = scmp.ne.s32.totalorder %s168, %s169
    %p181 = scmp.eq.s32.totalorder %s21, 1
    %p182 = por %p180, %p181
    %p184 = scmp.ne.s32.totalorder %s169, %s183
    %p185 = scmp.eq.s32.totalorder %s21, 0
    %p186 = por %p184, %p185
    %s188 = sadd.s32 %s187, 1
    %p191 = scmp.eq.s32.totalorder %s15, 1
    %p192 = scmp.ne.s32.totalorder %s187, %s189
    %p193 = scmp.eq.s32.totalorder %s15, 0
    %p194 = por %p192, %p193
    %p195 = scmp.ne.s32.totalorder %s187, %s189
    %p196 = scmp.eq.s32.totalorder %s20, 1
    %p197 = por %p195, %p196
    %p198 = scmp.ne.s32.totalorder %s189, %s190
    %p199 = scmp.eq.s32.totalorder %s20, 0
    %p200 = por %p198, %p199
    %p201 = scmp.ne.s32.totalorder %s189, %s190
    %p202 = scmp.eq.s32.totalorder %s21, 1
    %p203 = por %p201, %p202
    %p205 = scmp.ne.s32.totalorder %s190, %s204
    %p206 = scmp.eq.s32.totalorder %s21, 0
    %p207 = por %p205, %p206
    %s208 = ssub.s32 %s22, %s34
    %s209 = ssub.s32 %s23, %s30
    %s210 = sor.u32 %s208, %s209
    %p211 = scmp.eq.s32.totalorder %s210, 0
    %s213 = sadd.s32 %s212, 1
    %s214 = scalar_select %p211, %s212, %s213
    %p217 = pneg %p211
    %p218 = scmp.eq.s32.totalorder %s15, 1
    %p219 = por %p217, %p218
    %p220 = scmp.ne.s32.totalorder %s212, %s215
    %p221 = scmp.eq.s32.totalorder %s15, 0
    %p222 = por %p220, %p221
    %p223 = scmp.ne.s32.totalorder %s212, %s215
    %p224 = scmp.eq.s32.totalorder %s20, 1
    %p225 = por %p223, %p224
    %p226 = scmp.ne.s32.totalorder %s215, %s216
    %p227 = scmp.eq.s32.totalorder %s20, 0
    %p228 = por %p226, %p227
    %p229 = scmp.ne.s32.totalorder %s215, %s216
    %p230 = scmp.eq.s32.totalorder %s21, 1
    %p231 = por %p229, %p230
    %p233 = scmp.ne.s32.totalorder %s216, %s232
    %p234 = scmp.eq.s32.totalorder %s21, 0
    %p235 = por %p233, %p234
    %p236 = scmp.le.s32.totalorder 1, %s15
    %p237 = scmp.lt.s32.totalorder %s15, 3
    %p238 = pnand %p236, %p237
    %p239 = pneg %p238
    // Predicated region
    $region9: #{self_attention.1} parent=5 // pred_check
      _
    $region10: #{self_attention.1} parent=5 // pred_check_branch
      %241 = sbr.rel (%p238) target = $region12
    $region11: #{self_attention.1} parent=5 // pred_region
      %s242 = ssub.s32 %s15, 1
      // Predicated region
      $region13: #{self_attention.1} parent=11 // pred_check
        %p243 = pneg %p74
      $region14: #{self_attention.1} parent=11 // pred_check_branch
        %245 = sbr.rel (%p243) target = $region16
      $region15: #{self_attention.1} parent=11 // pred_region
        _
      $region16: #{self_attention.1} parent=11 // pred_fallthru
        _
      // Predicated region
      $region17: #{self_attention.1} parent=11 // pred_check
        %p246 = pneg %p95
      $region18: #{self_attention.1} parent=11 // pred_check_branch
        %248 = sbr.rel (%p246) target = $region20
      $region19: #{self_attention.1} parent=11 // pred_region
        _
      $region20: #{self_attention.1} parent=11 // pred_fallthru
        _
      // Predicated region
      $region21: #{self_attention.1} parent=11 // pred_check
        %p249 = pneg %p116
      $region22: #{self_attention.1} parent=11 // pred_check_branch
        %251 = sbr.rel (%p249) target = $region24
      $region23: #{self_attention.1} parent=11 // pred_region
        _
      $region24: #{self_attention.1} parent=11 // pred_fallthru
        _
      // Predicated region
      $region25: #{self_attention.1} parent=11 // pred_check
        %p252 = pneg %p137
      $region26: #{self_attention.1} parent=11 // pred_check_branch
        %254 = sbr.rel (%p252) target = $region28
      $region27: #{self_attention.1} parent=11 // pred_region
        _
      $region28: #{self_attention.1} parent=11 // pred_fallthru
        _
      // Predicated region
      $region29: #{self_attention.1} parent=11 // pred_check
        %p255 = pneg %p158
      $region30: #{self_attention.1} parent=11 // pred_check_branch
        %257 = sbr.rel (%p255) target = $region32
      $region31: #{self_attention.1} parent=11 // pred_region
        _
      $region32: #{self_attention.1} parent=11 // pred_fallthru
        _
      // Predicated region
      $region33: #{self_attention.1} parent=11 // pred_check
        %p258 = pneg %p179
      $region34: #{self_attention.1} parent=11 // pred_check_branch
        %260 = sbr.rel (%p258) target = $region36
      $region35: #{self_attention.1} parent=11 // pred_region
        _
      $region36: #{self_attention.1} parent=11 // pred_fallthru
        _
      // Predicated region
      $region37: #{self_attention.1} parent=11 // pred_check
        %p261 = pneg %p200
      $region38: #{self_attention.1} parent=11 // pred_check_branch
        %263 = sbr.rel (%p261) target = $region40
      $region39: #{self_attention.1} parent=11 // pred_region
        _
      $region40: #{self_attention.1} parent=11 // pred_fallthru
        _
    $region12: #{self_attention.1} parent=5 // pred_fallthru
      _
    %p264 = scmp.lt.s32.totalorder %s15, 2
    // Predicated region
    $region41: #{self_attention.1} parent=5 // pred_check
      %p265 = pneg %p264
    $region42: #{self_attention.1} parent=5 // pred_check_branch
      %267 = sbr.rel (%p265) target = $region44
    $region43: #{self_attention.1} parent=5 // pred_region
      // Predicated region
      $region45: #{self_attention.1} parent=43 // pred_check
        %p268 = pneg %p47
      $region46: #{self_attention.1} parent=43 // pred_check_branch
        %270 = sbr.rel (%p268) target = $region48
      $region47: #{self_attention.1} parent=43 // pred_region
        %p271 = scmp.lt.s32.totalorder %s22, 1
        %s272 = scalar_select %p271, %s22, 1
        %s273 = smul.addr %s272, 32
        %s274 = smul.addr %s273, 4
        %s275 = scalar_lea.vmem %s0, %s274
      $region48: #{self_attention.1} parent=43 // pred_fallthru
        _
    $region44: #{self_attention.1} parent=5 // pred_fallthru
      _
    %p276 = scmp.le.s32.totalorder 1, %s15
    %p277 = scmp.lt.s32.totalorder %s15, 3
    %p278 = pnand %p276, %p277
    %p279 = pneg %p278
    // Predicated region
    $region49: #{self_attention.1} parent=5 // pred_check
      _
    $region50: #{self_attention.1} parent=5 // pred_check_branch
      %281 = sbr.rel (%p278) target = $region52
    $region51: #{self_attention.1} parent=5 // pred_region
      %s282 = ssub.s32 %s15, 1
      %p283 = scmp.lt.s32.totalorder %s24, 1
      %s284 = scalar_select %p283, %s24, 1
      %s285 = smul.addr %s284, 32
      %s286 = smul.addr %s285, 4
      %s287 = scalar_lea.vmem %s0, %s286
      %p288 = pneg %p53
      %p289 = pneg %p50
      %p290 = pneg %p74
      %p291 = pneg %p71
      %p292 = pneg %p95
      %p293 = pneg %p92
      %p294 = pneg %p116
      %p295 = pneg %p113
      %p296 = pneg %p137
      %p297 = pneg %p134
      %p298 = pneg %p158
      %p299 = pneg %p155
      %p300 = pneg %p179
      %p301 = pneg %p176
      %p302 = pneg %p200
      %p303 = pneg %p197
      %p304 = pneg %p228
      %p305 = pneg %p225
      %s306 = smul.u32 2, %s25
      %p307 = scmp.lt.s32.totalorder %s24, 1
      %s308 = scalar_select %p307, %s24, 1
      %p309 = scmp.lt.s32.totalorder %s306, 1
      %s310 = scalar_select %p309, %s306, 1
      %s311 = smul.addr %s308, 32
      %s312 = sadd.s32 %s310, %s311
      %s313 = smul.addr %s312, 8
      %s314 = scalar_lea.vmem %s8, %s313
      %p315 = scmp.lt.s32.totalorder %s24, 1
      %s316 = scalar_select %p315, %s24, 1
      %s317 = smul.addr %s316, 32
      %s318 = smul.addr %s317, 4
      %s319 = scalar_lea.vmem %s0, %s318
      %s320 = smul.u32 2, %s25
      %p321 = scmp.lt.s32.totalorder %s24, 1
      %s322 = scalar_select %p321, %s24, 1
      %p323 = scmp.lt.s32.totalorder %s320, 1
      %s324 = scalar_select %p323, %s320, 1
      %s325 = smul.addr %s322, 32
      %s326 = sadd.s32 %s324, %s325
      %s327 = smul.addr %s326, 8
      %s328 = scalar_lea.vmem %s8, %s327
      %s329 = smul.u32 2, %s25
      %p331 = scmp.eq.s32.totalorder %s25, 0
      // Predicated region
      $region53: #{self_attention.1} parent=51 // pred_check
        %p332 = pneg %p331
      $region54: #{self_attention.1} parent=51 // pred_check_branch
        %334 = sbr.rel (%p332) target = $region56
      $region55: #{self_attention.1} parent=51 // pred_region
        %v335 = vld [vmem:[%s319] sm:$0xff]
        %v336 = vld [vmem:[%s319 + $0x8] sm:$0xff]
        %v337 = vld [vmem:[%s319 + $0x10] sm:$0xff]
        %v338 = vld [vmem:[%s319 + $0x18] sm:$0xff]
        %v339 = vld [vmem:[%s319 + $0x20] sm:$0xff]
        %v340 = vld [vmem:[%s319 + $0x28] sm:$0xff]
        %v341 = vld [vmem:[%s319 + $0x30] sm:$0xff]
        %v342 = vld [vmem:[%s319 + $0x38] sm:$0xff]
        %v343 = vld [vmem:[%s319 + $0x40] sm:$0xff]
        %v344 = vld [vmem:[%s319 + $0x48] sm:$0xff]
        %v345 = vld [vmem:[%s319 + $0x50] sm:$0xff]
        %v346 = vld [vmem:[%s319 + $0x58] sm:$0xff]
        %v347 = vld [vmem:[%s319 + $0x60] sm:$0xff]
        %v348 = vld [vmem:[%s319 + $0x68] sm:$0xff]
        %v349 = vld [vmem:[%s319 + $0x70] sm:$0xff]
        %v350 = vld [vmem:[%s319 + $0x78] sm:$0xff]
        %v351 = vld [vmem:[%s2] sm:$0xf]
        %v352 = vld [vmem:[%s2 + $0x4] sm:$0xf]
        %v353 = vld [vmem:[%s5] sm:$0xff]
        %v354 = vld [vmem:[%s5 + $0x8] sm:$0xff]
        %356 = vset.pattern.permute.xlu0 0
        %357 = vperm.xlu0 %356, %v353
        %v358 = vpop.permute.xlu0 %357
        %361 = vset.pattern.permute.xlu0 0
        %362 = vperm.xlu0 %361, %v354
        %v363 = vpop.permute.xlu0 %362
        %v367 = vunpack.c.l.b16 %v351
        %v368 = vunpack.c.l.b16 %v352
        %v369 = vpack.c.b16 %v368, %v367
        %v387 = vunpack.c.l.b16 %v335
        %v388 = vunpack.c.h.b16 %v335
        %v389 = vunpack.c.l.b16 %v336
        %v390 = vunpack.c.h.b16 %v336
        %v391 = vunpack.c.l.b16 %v337
        %v392 = vunpack.c.h.b16 %v337
        %v393 = vunpack.c.l.b16 %v338
        %v394 = vunpack.c.h.b16 %v338
        %v395 = vunpack.c.l.b16 %v339
        %v396 = vunpack.c.h.b16 %v339
        %v397 = vunpack.c.l.b16 %v340
        %v398 = vunpack.c.h.b16 %v340
        %v399 = vunpack.c.l.b16 %v341
        %v400 = vunpack.c.h.b16 %v341
        %v401 = vunpack.c.l.b16 %v342
        %v402 = vunpack.c.h.b16 %v342
        %v403 = vunpack.c.l.b16 %v343
        %v404 = vunpack.c.h.b16 %v343
        %v405 = vunpack.c.l.b16 %v344
        %v406 = vunpack.c.h.b16 %v344
        %v407 = vunpack.c.l.b16 %v345
        %v408 = vunpack.c.h.b16 %v345
        %v409 = vunpack.c.l.b16 %v346
        %v410 = vunpack.c.h.b16 %v346
        %v411 = vunpack.c.l.b16 %v347
        %v412 = vunpack.c.h.b16 %v347
        %v413 = vunpack.c.l.b16 %v348
        %v414 = vunpack.c.h.b16 %v348
        %v415 = vunpack.c.l.b16 %v349
        %v416 = vunpack.c.h.b16 %v349
        %v417 = vunpack.c.l.b16 %v350
        %v418 = vunpack.c.h.b16 %v350
        %v419 = vpack.c.b16 %v389, %v387
        %v420 = vpack.c.b16 %v390, %v388
        %v421 = vpack.c.b16 %v393, %v391
        %v422 = vpack.c.b16 %v394, %v392
        %v423 = vpack.c.b16 %v397, %v395
        %v424 = vpack.c.b16 %v398, %v396
        %v425 = vpack.c.b16 %v401, %v399
        %v426 = vpack.c.b16 %v402, %v400
        %v427 = vpack.c.b16 %v405, %v403
        %v428 = vpack.c.b16 %v406, %v404
        %v429 = vpack.c.b16 %v409, %v407
        %v430 = vpack.c.b16 %v410, %v408
        %v431 = vpack.c.b16 %v413, %v411
        %v432 = vpack.c.b16 %v414, %v412
        %v433 = vpack.c.b16 %v417, %v415
        %v434 = vpack.c.b16 %v418, %v416
        %451 = vmatpush.bf16.msra.mxu0 %v433
        %452 = vmatpush.bf16.msra.mxu0 %v431
        %453 = vmatpush.bf16.msra.mxu0 %v429
        %454 = vmatpush.bf16.msra.mxu0 %v427
        %455 = vmatpush.bf16.msra.mxu0 %v425
        %456 = vmatpush.bf16.msra.mxu0 %v423
        %457 = vmatpush.bf16.msra.mxu0 %v421
        %458 = vmatpush.bf16.msra.mxu0 %v419
        %459 = vmatmul.bf16.gmra.mxu0 %v369
        %v460 = vpop.f32.mrf.mxu0
        %v461 = vadd.f32 %v358, %v460
        %v462 = vpop.f32.mrf.mxu0
        %v463 = vadd.f32 %v363, %v462
        %464 = vdwg.mxu0
        %465 = vmatpush.bf16.msra.mxu0 %v434
        %466 = vmatpush.bf16.msra.mxu0 %v432
        %467 = vmatpush.bf16.msra.mxu0 %v430
        %468 = vmatpush.bf16.msra.mxu0 %v428
        %469 = vmatpush.bf16.msra.mxu0 %v426
        %470 = vmatpush.bf16.msra.mxu0 %v424
        %471 = vmatpush.bf16.msra.mxu0 %v422
        %472 = vmatpush.bf16.msra.mxu0 %v420
        %473 = vmatmul.bf16.gmra.mxu0 %v369
        %v474 = vpop.f32.mrf.mxu0
        %v475 = vadd.f32 %v358, %v474
        %v476 = vpop.f32.mrf.mxu0
        %v477 = vadd.f32 %v363, %v476
        %478 = vdwg.mxu0
        %479 = vxpose.xlu0.b32.start [1/16] %v461, 128
        %480 = vxpose.xlu0.b32.cont [2/16] %v463, 128
        %481 = vxpose.xlu0.b32.cont [3/16] 0.0, 128
        %482 = vxpose.xlu0.b32.cont [4/16] 0.0, 128
        %483 = vxpose.xlu0.b32.cont [5/16] 0.0, 128
        %484 = vxpose.xlu0.b32.cont [6/16] 0.0, 128
        %485 = vxpose.xlu0.b32.cont [7/16] 0.0, 128
        %486 = vxpose.xlu0.b32.cont [8/16] 0.0, 128
        %487 = vxpose.xlu0.b32.cont [9/16] 0.0, 128
        %488 = vxpose.xlu0.b32.cont [10/16] 0.0, 128
        %489 = vxpose.xlu0.b32.cont [11/16] 0.0, 128
        %490 = vxpose.xlu0.b32.cont [12/16] 0.0, 128
        %491 = vxpose.xlu0.b32.cont [13/16] 0.0, 128
        %492 = vxpose.xlu0.b32.cont [14/16] 0.0, 128
        %493 = vxpose.xlu0.b32.cont [15/16] 0.0, 128
        %494 = vxpose.xlu0.b32.end [16/16] 0.0, 128
        %v495 = vpop.trf.xlu0
        %v496 = vpop.trf.xlu0
        %v497 = vpop.trf.xlu0
        %v498 = vpop.trf.xlu0
        %v499 = vpop.trf.xlu0
        %v500 = vpop.trf.xlu0
        %v501 = vpop.trf.xlu0
        %v502 = vpop.trf.xlu0
        %v503 = vpop.trf.xlu0
        %v504 = vpop.trf.xlu0
        %v505 = vpop.trf.xlu0
        %v506 = vpop.trf.xlu0
        %v507 = vpop.trf.xlu0
        %v508 = vpop.trf.xlu0
        %v509 = vpop.trf.xlu0
        %v510 = vpop.trf.xlu0
        %511 = vxpose.xlu0.b32.start [1/16] %v475, 128
        %512 = vxpose.xlu0.b32.cont [2/16] %v477, 128
        %513 = vxpose.xlu0.b32.cont [3/16] 0.0, 128
        %514 = vxpose.xlu0.b32.cont [4/16] 0.0, 128
        %515 = vxpose.xlu0.b32.cont [5/16] 0.0, 128
        %516 = vxpose.xlu0.b32.cont [6/16] 0.0, 128
        %517 = vxpose.xlu0.b32.cont [7/16] 0.0, 128
        %518 = vxpose.xlu0.b32.cont [8/16] 0.0, 128
        %519 = vxpose.xlu0.b32.cont [9/16] 0.0, 128
        %520 = vxpose.xlu0.b32.cont [10/16] 0.0, 128
        %521 = vxpose.xlu0.b32.cont [11/16] 0.0, 128
        %522 = vxpose.xlu0.b32.cont [12/16] 0.0, 128
        %523 = vxpose.xlu0.b32.cont [13/16] 0.0, 128
        %524 = vxpose.xlu0.b32.cont [14/16] 0.0, 128
        %525 = vxpose.xlu0.b32.cont [15/16] 0.0, 128
        %526 = vxpose.xlu0.b32.end [16/16] 0.0, 128
        %v527 = vpop.trf.xlu0
        %v528 = vpop.trf.xlu0
        %v529 = vpop.trf.xlu0
        %v530 = vpop.trf.xlu0
        %v531 = vpop.trf.xlu0
        %v532 = vpop.trf.xlu0
        %v533 = vpop.trf.xlu0
        %v534 = vpop.trf.xlu0
        %v535 = vpop.trf.xlu0
        %v536 = vpop.trf.xlu0
        %v537 = vpop.trf.xlu0
        %v538 = vpop.trf.xlu0
        %v539 = vpop.trf.xlu0
        %v540 = vpop.trf.xlu0
        %v541 = vpop.trf.xlu0
        %v542 = vpop.trf.xlu0
        %v543 = vpack.c.bf16 %v495, %v495
        %v544 = vpack.c.bf16 %v496, %v496
        %v545 = vpack.c.bf16 %v497, %v497
        %v546 = vpack.c.bf16 %v498, %v498
        %v547 = vpack.c.bf16 %v499, %v499
        %v548 = vpack.c.bf16 %v500, %v500
        %v549 = vpack.c.bf16 %v501, %v501
        %v550 = vpack.c.bf16 %v502, %v502
        %v551 = vpack.c.bf16 %v503, %v503
        %v552 = vpack.c.bf16 %v504, %v504
        %v553 = vpack.c.bf16 %v505, %v505
        %v554 = vpack.c.bf16 %v506, %v506
        %v555 = vpack.c.bf16 %v507, %v507
        %v556 = vpack.c.bf16 %v508, %v508
        %v557 = vpack.c.bf16 %v509, %v509
        %v558 = vpack.c.bf16 %v510, %v510
        %v559 = vpack.c.bf16 %v527, %v527
        %v560 = vpack.c.bf16 %v528, %v528
        %v561 = vpack.c.bf16 %v529, %v529
        %v562 = vpack.c.bf16 %v530, %v530
        %v563 = vpack.c.bf16 %v531, %v531
        %v564 = vpack.c.bf16 %v532, %v532
        %v565 = vpack.c.bf16 %v533, %v533
        %v566 = vpack.c.bf16 %v534, %v534
        %v567 = vpack.c.bf16 %v535, %v535
        %v568 = vpack.c.bf16 %v536, %v536
        %v569 = vpack.c.bf16 %v537, %v537
        %v570 = vpack.c.bf16 %v538, %v538
        %v571 = vpack.c.bf16 %v539, %v539
        %v572 = vpack.c.bf16 %v540, %v540
        %v573 = vpack.c.bf16 %v541, %v541
        %v574 = vpack.c.bf16 %v542, %v542
        %vm575 = vcmask 125952
        %576 = vst.msk [vmem:[#allocation2] sm:$0xf] %vm575, %v543
        %577 = vst.msk [vmem:[#allocation2 + $0x4] sm:$0xf] %vm575, %v544
        %578 = vst.msk [vmem:[#allocation2 + $0x8] sm:$0xf] %vm575, %v545
        %579 = vst.msk [vmem:[#allocation2 + $0xc] sm:$0xf] %vm575, %v546
        %580 = vst.msk [vmem:[#allocation2 + $0x10] sm:$0xf] %vm575, %v547
        %581 = vst.msk [vmem:[#allocation2 + $0x14] sm:$0xf] %vm575, %v548
        %582 = vst.msk [vmem:[#allocation2 + $0x18] sm:$0xf] %vm575, %v549
        %583 = vst.msk [vmem:[#allocation2 + $0x1c] sm:$0xf] %vm575, %v550
        %584 = vst.msk [vmem:[#allocation2 + $0x20] sm:$0xf] %vm575, %v551
        %585 = vst.msk [vmem:[#allocation2 + $0x24] sm:$0xf] %vm575, %v552
        %586 = vst.msk [vmem:[#allocation2 + $0x28] sm:$0xf] %vm575, %v553
        %587 = vst.msk [vmem:[#allocation2 + $0x2c] sm:$0xf] %vm575, %v554
        %588 = vst.msk [vmem:[#allocation2 + $0x30] sm:$0xf] %vm575, %v555
        %589 = vst.msk [vmem:[#allocation2 + $0x34] sm:$0xf] %vm575, %v556
        %590 = vst.msk [vmem:[#allocation2 + $0x38] sm:$0xf] %vm575, %v557
        %591 = vst.msk [vmem:[#allocation2 + $0x3c] sm:$0xf] %vm575, %v558
        %592 = vst.msk [vmem:[#allocation2 + $0x40] sm:$0xf] %vm575, %v559
        %593 = vst.msk [vmem:[#allocation2 + $0x44] sm:$0xf] %vm575, %v560
        %594 = vst.msk [vmem:[#allocation2 + $0x48] sm:$0xf] %vm575, %v561
        %595 = vst.msk [vmem:[#allocation2 + $0x4c] sm:$0xf] %vm575, %v562
        %596 = vst.msk [vmem:[#allocation2 + $0x50] sm:$0xf] %vm575, %v563
        %597 = vst.msk [vmem:[#allocation2 + $0x54] sm:$0xf] %vm575, %v564
        %598 = vst.msk [vmem:[#allocation2 + $0x58] sm:$0xf] %vm575, %v565
        %599 = vst.msk [vmem:[#allocation2 + $0x5c] sm:$0xf] %vm575, %v566
        %600 = vst.msk [vmem:[#allocation2 + $0x60] sm:$0xf] %vm575, %v567
        %601 = vst.msk [vmem:[#allocation2 + $0x64] sm:$0xf] %vm575, %v568
        %602 = vst.msk [vmem:[#allocation2 + $0x68] sm:$0xf] %vm575, %v569
        %603 = vst.msk [vmem:[#allocation2 + $0x6c] sm:$0xf] %vm575, %v570
        %604 = vst.msk [vmem:[#allocation2 + $0x70] sm:$0xf] %vm575, %v571
        %605 = vst.msk [vmem:[#allocation2 + $0x74] sm:$0xf] %vm575, %v572
        %606 = vst.msk [vmem:[#allocation2 + $0x78] sm:$0xf] %vm575, %v573
        %607 = vst.msk [vmem:[#allocation2 + $0x7c] sm:$0xf] %vm575, %v574
        %v608 = vld [vmem:[%s3] sm:$0xf]
        %v609 = vld [vmem:[%s3 + $0x4] sm:$0xf]
        %v610 = vld [vmem:[%s3 + $0x8] sm:$0xf]
        %v611 = vld [vmem:[%s3 + $0xc] sm:$0xf]
        %v612 = vld [vmem:[%s3 + $0x10] sm:$0xf]
        %v613 = vld [vmem:[%s3 + $0x14] sm:$0xf]
        %v614 = vld [vmem:[%s3 + $0x18] sm:$0xf]
        %v615 = vld [vmem:[%s3 + $0x1c] sm:$0xf]
        %v616 = vld [vmem:[%s3 + $0x20] sm:$0xf]
        %v617 = vld [vmem:[%s3 + $0x24] sm:$0xf]
        %v618 = vld [vmem:[%s3 + $0x28] sm:$0xf]
        %v619 = vld [vmem:[%s3 + $0x2c] sm:$0xf]
        %v620 = vld [vmem:[%s3 + $0x30] sm:$0xf]
        %v621 = vld [vmem:[%s3 + $0x34] sm:$0xf]
        %v622 = vld [vmem:[%s3 + $0x38] sm:$0xf]
        %v623 = vld [vmem:[%s3 + $0x3c] sm:$0xf]
        %v624 = vld [vmem:[%s6] sm:$0xff]
        %v625 = vld [vmem:[%s6 + $0x8] sm:$0xff]
        %v626 = vld [vmem:[%s6 + $0x10] sm:$0xff]
        %v627 = vld [vmem:[%s6 + $0x18] sm:$0xff]
        %v628 = vld [vmem:[%s6 + $0x20] sm:$0xff]
        %v629 = vld [vmem:[%s6 + $0x28] sm:$0xff]
        %v630 = vld [vmem:[%s6 + $0x30] sm:$0xff]
        %v631 = vld [vmem:[%s6 + $0x38] sm:$0xff]
        %v632 = vld [vmem:[%s6 + $0x40] sm:$0xff]
        %v633 = vld [vmem:[%s6 + $0x48] sm:$0xff]
        %v634 = vld [vmem:[%s6 + $0x50] sm:$0xff]
        %v635 = vld [vmem:[%s6 + $0x58] sm:$0xff]
        %v636 = vld [vmem:[%s6 + $0x60] sm:$0xff]
        %v637 = vld [vmem:[%s6 + $0x68] sm:$0xff]
        %v638 = vld [vmem:[%s6 + $0x70] sm:$0xff]
        %v639 = vld [vmem:[%s6 + $0x78] sm:$0xff]
        %641 = vset.pattern.permute.xlu0 0
        %642 = vperm.xlu0 %641, %v624
        %v643 = vpop.permute.xlu0 %642
        %646 = vset.pattern.permute.xlu0 0
        %647 = vperm.xlu0 %646, %v625
        %v648 = vpop.permute.xlu0 %647
        %651 = vset.pattern.permute.xlu0 0
        %652 = vperm.xlu0 %651, %v626
        %v653 = vpop.permute.xlu0 %652
        %656 = vset.pattern.permute.xlu0 0
        %657 = vperm.xlu0 %656, %v627
        %v658 = vpop.permute.xlu0 %657
        %661 = vset.pattern.permute.xlu0 0
        %662 = vperm.xlu0 %661, %v628
        %v663 = vpop.permute.xlu0 %662
        %666 = vset.pattern.permute.xlu0 0
        %667 = vperm.xlu0 %666, %v629
        %v668 = vpop.permute.xlu0 %667
        %671 = vset.pattern.permute.xlu0 0
        %672 = vperm.xlu0 %671, %v630
        %v673 = vpop.permute.xlu0 %672
        %676 = vset.pattern.permute.xlu0 0
        %677 = vperm.xlu0 %676, %v631
        %v678 = vpop.permute.xlu0 %677
        %681 = vset.pattern.permute.xlu0 0
        %682 = vperm.xlu0 %681, %v632
        %v683 = vpop.permute.xlu0 %682
        %686 = vset.pattern.permute.xlu0 0
        %687 = vperm.xlu0 %686, %v633
        %v688 = vpop.permute.xlu0 %687
        %691 = vset.pattern.permute.xlu0 0
        %692 = vperm.xlu0 %691, %v634
        %v693 = vpop.permute.xlu0 %692
        %696 = vset.pattern.permute.xlu0 0
        %697 = vperm.xlu0 %696, %v635
        %v698 = vpop.permute.xlu0 %697
        %701 = vset.pattern.permute.xlu0 0
        %702 = vperm.xlu0 %701, %v636
        %v703 = vpop.permute.xlu0 %702
        %706 = vset.pattern.permute.xlu0 0
        %707 = vperm.xlu0 %706, %v637
        %v708 = vpop.permute.xlu0 %707
        %711 = vset.pattern.permute.xlu0 0
        %712 = vperm.xlu0 %711, %v638
        %v713 = vpop.permute.xlu0 %712
        %716 = vset.pattern.permute.xlu0 0
        %717 = vperm.xlu0 %716, %v639
        %v718 = vpop.permute.xlu0 %717
        %v736 = vunpack.c.l.b16 %v608
        %v737 = vunpack.c.l.b16 %v609
        %v738 = vunpack.c.l.b16 %v610
        %v739 = vunpack.c.l.b16 %v611
        %v740 = vunpack.c.l.b16 %v612
        %v741 = vunpack.c.l.b16 %v613
        %v742 = vunpack.c.l.b16 %v614
        %v743 = vunpack.c.l.b16 %v615
        %v744 = vunpack.c.l.b16 %v616
        %v745 = vunpack.c.l.b16 %v617
        %v746 = vunpack.c.l.b16 %v618
        %v747 = vunpack.c.l.b16 %v619
        %v748 = vunpack.c.l.b16 %v620
        %v749 = vunpack.c.l.b16 %v621
        %v750 = vunpack.c.l.b16 %v622
        %v751 = vunpack.c.l.b16 %v623
        %v752 = vpack.c.b16 %v737, %v736
        %v753 = vpack.c.b16 %v739, %v738
        %v754 = vpack.c.b16 %v741, %v740
        %v755 = vpack.c.b16 %v743, %v742
        %v756 = vpack.c.b16 %v745, %v744
        %v757 = vpack.c.b16 %v747, %v746
        %v758 = vpack.c.b16 %v749, %v748
        %v759 = vpack.c.b16 %v751, %v750
        %768 = vmatpush.bf16.msra.mxu0 %v433
        %769 = vmatpush.bf16.msra.mxu0 %v431
        %770 = vmatpush.bf16.msra.mxu0 %v429
        %771 = vmatpush.bf16.msra.mxu0 %v427
        %772 = vmatpush.bf16.msra.mxu0 %v425
        %773 = vmatpush.bf16.msra.mxu0 %v423
        %774 = vmatpush.bf16.msra.mxu0 %v421
        %775 = vmatpush.bf16.msra.mxu0 %v419
        %776 = vmatmul.bf16.gmra.mxu0 %v752
        %v777 = vpop.f32.mrf.mxu0
        %v778 = vadd.f32 %v643, %v777
        %v779 = vpop.f32.mrf.mxu0
        %v780 = vadd.f32 %v648, %v779
        %781 = vmatmul.bf16.gmra.mxu0 %v753
        %v782 = vpop.f32.mrf.mxu0
        %v783 = vadd.f32 %v653, %v782
        %v784 = vpop.f32.mrf.mxu0
        %v785 = vadd.f32 %v658, %v784
        %786 = vmatmul.bf16.gmra.mxu0 %v754
        %v787 = vpop.f32.mrf.mxu0
        %v788 = vadd.f32 %v663, %v787
        %v789 = vpop.f32.mrf.mxu0
        %v790 = vadd.f32 %v668, %v789
        %791 = vmatmul.bf16.gmra.mxu0 %v755
        %v792 = vpop.f32.mrf.mxu0
        %v793 = vadd.f32 %v673, %v792
        %v794 = vpop.f32.mrf.mxu0
        %v795 = vadd.f32 %v678, %v794
        %796 = vmatmul.bf16.gmra.mxu0 %v756
        %v797 = vpop.f32.mrf.mxu0
        %v798 = vadd.f32 %v683, %v797
        %v799 = vpop.f32.mrf.mxu0
        %v800 = vadd.f32 %v688, %v799
        %801 = vmatmul.bf16.gmra.mxu0 %v757
        %v802 = vpop.f32.mrf.mxu0
        %v803 = vadd.f32 %v693, %v802
        %v804 = vpop.f32.mrf.mxu0
        %v805 = vadd.f32 %v698, %v804
        %806 = vmatmul.bf16.gmra.mxu0 %v758
        %v807 = vpop.f32.mrf.mxu0
        %v808 = vadd.f32 %v703, %v807
        %v809 = vpop.f32.mrf.mxu0
        %v810 = vadd.f32 %v708, %v809
        %811 = vmatmul.bf16.gmra.mxu0 %v759
        %v812 = vpop.f32.mrf.mxu0
        %v813 = vadd.f32 %v713, %v812
        %v814 = vpop.f32.mrf.mxu0
        %v815 = vadd.f32 %v718, %v814
        %816 = vdwg.mxu0
        %817 = vmatpush.bf16.msra.mxu0 %v434
        %818 = vmatpush.bf16.msra.mxu0 %v432
        %819 = vmatpush.bf16.msra.mxu0 %v430
        %820 = vmatpush.bf16.msra.mxu0 %v428
        %821 = vmatpush.bf16.msra.mxu0 %v426
        %822 = vmatpush.bf16.msra.mxu0 %v424
        %823 = vmatpush.bf16.msra.mxu0 %v422
        %824 = vmatpush.bf16.msra.mxu0 %v420
        %825 = vmatmul.bf16.gmra.mxu0 %v752
        %v826 = vpop.f32.mrf.mxu0
        %v827 = vadd.f32 %v643, %v826
        %v828 = vpop.f32.mrf.mxu0
        %v829 = vadd.f32 %v648, %v828
        %830 = vmatmul.bf16.gmra.mxu0 %v753
        %v831 = vpop.f32.mrf.mxu0
        %v832 = vadd.f32 %v653, %v831
        %v833 = vpop.f32.mrf.mxu0
        %v834 = vadd.f32 %v658, %v833
        %835 = vmatmul.bf16.gmra.mxu0 %v754
        %v836 = vpop.f32.mrf.mxu0
        %v837 = vadd.f32 %v663, %v836
        %v838 = vpop.f32.mrf.mxu0
        %v839 = vadd.f32 %v668, %v838
        %840 = vmatmul.bf16.gmra.mxu0 %v755
        %v841 = vpop.f32.mrf.mxu0
        %v842 = vadd.f32 %v673, %v841
        %v843 = vpop.f32.mrf.mxu0
        %v844 = vadd.f32 %v678, %v843
        %845 = vmatmul.bf16.gmra.mxu0 %v756
        %v846 = vpop.f32.mrf.mxu0
        %v847 = vadd.f32 %v683, %v846
        %v848 = vpop.f32.mrf.mxu0
        %v849 = vadd.f32 %v688, %v848
        %850 = vmatmul.bf16.gmra.mxu0 %v757
        %v851 = vpop.f32.mrf.mxu0
        %v852 = vadd.f32 %v693, %v851
        %v853 = vpop.f32.mrf.mxu0
        %v854 = vadd.f32 %v698, %v853
        %855 = vmatmul.bf16.gmra.mxu0 %v758
        %v856 = vpop.f32.mrf.mxu0
        %v857 = vadd.f32 %v703, %v856
        %v858 = vpop.f32.mrf.mxu0
        %v859 = vadd.f32 %v708, %v858
        %860 = vmatmul.bf16.gmra.mxu0 %v759
        %v861 = vpop.f32.mrf.mxu0
        %v862 = vadd.f32 %v713, %v861
        %v863 = vpop.f32.mrf.mxu0
        %v864 = vadd.f32 %v718, %v863
        %865 = vdwg.mxu0
        %v866 = vpack.c.bf16 %v827, %v778
        %v867 = vpack.c.bf16 %v829, %v780
        %v868 = vpack.c.bf16 %v832, %v783
        %v869 = vpack.c.bf16 %v834, %v785
        %v870 = vpack.c.bf16 %v837, %v788
        %v871 = vpack.c.bf16 %v839, %v790
        %v872 = vpack.c.bf16 %v842, %v793
        %v873 = vpack.c.bf16 %v844, %v795
        %v874 = vpack.c.bf16 %v847, %v798
        %v875 = vpack.c.bf16 %v849, %v800
        %v876 = vpack.c.bf16 %v852, %v803
        %v877 = vpack.c.bf16 %v854, %v805
        %v878 = vpack.c.bf16 %v857, %v808
        %v879 = vpack.c.bf16 %v859, %v810
        %v880 = vpack.c.bf16 %v862, %v813
        %v881 = vpack.c.bf16 %v864, %v815
        %882 = vst [vmem:[#allocation3] sm:$0xff] %v866
        %883 = vst [vmem:[#allocation3 + $0x8] sm:$0xff] %v867
        %884 = vst [vmem:[#allocation3 + $0x10] sm:$0xff] %v868
        %885 = vst [vmem:[#allocation3 + $0x18] sm:$0xff] %v869
        %886 = vst [vmem:[#allocation3 + $0x20] sm:$0xff] %v870
        %887 = vst [vmem:[#allocation3 + $0x28] sm:$0xff] %v871
        %888 = vst [vmem:[#allocation3 + $0x30] sm:$0xff] %v872
        %889 = vst [vmem:[#allocation3 + $0x38] sm:$0xff] %v873
        %890 = vst [vmem:[#allocation3 + $0x40] sm:$0xff] %v874
        %891 = vst [vmem:[#allocation3 + $0x48] sm:$0xff] %v875
        %892 = vst [vmem:[#allocation3 + $0x50] sm:$0xff] %v876
        %893 = vst [vmem:[#allocation3 + $0x58] sm:$0xff] %v877
        %894 = vst [vmem:[#allocation3 + $0x60] sm:$0xff] %v878
        %895 = vst [vmem:[#allocation3 + $0x68] sm:$0xff] %v879
        %896 = vst [vmem:[#allocation3 + $0x70] sm:$0xff] %v880
        %897 = vst [vmem:[#allocation3 + $0x78] sm:$0xff] %v881
      $region56: #{self_attention.1} parent=51 // pred_fallthru
        _
      %s898 = smul.u32 %s25, 256
      %s899 = sshra.s32 %s898, 7
      %s900 = sand.u32 %s898, 127
      %s901 = smul.addr %s899, 4
      %s902 = scalar_lea.vmem %s319, %s901
      %v903 = vld [vmem:[%s902] sm:$0xff]
      %v904 = vld [vmem:[%s902 + $0x8] sm:$0xff]
      %v905 = vld [vmem:[%s902 + $0x10] sm:$0xff]
      %v906 = vld [vmem:[%s902 + $0x18] sm:$0xff]
      %v907 = vld [vmem:[%s902 + $0x20] sm:$0xff]
      %v908 = vld [vmem:[%s902 + $0x28] sm:$0xff]
      %v909 = vld [vmem:[%s902 + $0x30] sm:$0xff]
      %v910 = vld [vmem:[%s902 + $0x38] sm:$0xff]
      %v911 = vld [vmem:[%s902 + $0x40] sm:$0xff]
      %v912 = vld [vmem:[%s902 + $0x48] sm:$0xff]
      %v913 = vld [vmem:[%s902 + $0x50] sm:$0xff]
      %v914 = vld [vmem:[%s902 + $0x58] sm:$0xff]
      %v915 = vld [vmem:[%s902 + $0x60] sm:$0xff]
      %v916 = vld [vmem:[%s902 + $0x68] sm:$0xff]
      %v917 = vld [vmem:[%s902 + $0x70] sm:$0xff]
      %v918 = vld [vmem:[%s902 + $0x78] sm:$0xff]
      %v919 = vld [vmem:[%s1] sm:$0xf]
      %v920 = vld [vmem:[%s1 + $0x4] sm:$0xf]
      %v921 = vld [vmem:[%s4] sm:$0xff]
      %v922 = vld [vmem:[%s4 + $0x8] sm:$0xff]
      %924 = vset.pattern.permute.xlu0 0
      %925 = vperm.xlu0 %924, %v921
      %v926 = vpop.permute.xlu0 %925
      %929 = vset.pattern.permute.xlu0 0
      %930 = vperm.xlu0 %929, %v922
      %v931 = vpop.permute.xlu0 %930
      %v935 = vunpack.c.l.b16 %v919
      %v936 = vunpack.c.l.b16 %v920
      %v937 = vpack.c.b16 %v936, %v935
      %v955 = vunpack.c.l.b16 %v903
      %v956 = vunpack.c.h.b16 %v903
      %v957 = vunpack.c.l.b16 %v904
      %v958 = vunpack.c.h.b16 %v904
      %v959 = vunpack.c.l.b16 %v905
      %v960 = vunpack.c.h.b16 %v905
      %v961 = vunpack.c.l.b16 %v906
      %v962 = vunpack.c.h.b16 %v906
      %v963 = vunpack.c.l.b16 %v907
      %v964 = vunpack.c.h.b16 %v907
      %v965 = vunpack.c.l.b16 %v908
      %v966 = vunpack.c.h.b16 %v908
      %v967 = vunpack.c.l.b16 %v909
      %v968 = vunpack.c.h.b16 %v909
      %v969 = vunpack.c.l.b16 %v910
      %v970 = vunpack.c.h.b16 %v910
      %v971 = vunpack.c.l.b16 %v911
      %v972 = vunpack.c.h.b16 %v911
      %v973 = vunpack.c.l.b16 %v912
      %v974 = vunpack.c.h.b16 %v912
      %v975 = vunpack.c.l.b16 %v913
      %v976 = vunpack.c.h.b16 %v913
      %v977 = vunpack.c.l.b16 %v914
      %v978 = vunpack.c.h.b16 %v914
      %v979 = vunpack.c.l.b16 %v915
      %v980 = vunpack.c.h.b16 %v915
      %v981 = vunpack.c.l.b16 %v916
      %v982 = vunpack.c.h.b16 %v916
      %v983 = vunpack.c.l.b16 %v917
      %v984 = vunpack.c.h.b16 %v917
      %v985 = vunpack.c.l.b16 %v918
      %v986 = vunpack.c.h.b16 %v918
      %v987 = vpack.c.b16 %v957, %v955
      %v988 = vpack.c.b16 %v958, %v956
      %v989 = vpack.c.b16 %v961, %v959
      %v990 = vpack.c.b16 %v962, %v960
      %v991 = vpack.c.b16 %v965, %v963
      %v992 = vpack.c.b16 %v966, %v964
      %v993 = vpack.c.b16 %v969, %v967
      %v994 = vpack.c.b16 %v970, %v968
      %v995 = vpack.c.b16 %v973, %v971
      %v996 = vpack.c.b16 %v974, %v972
      %v997 = vpack.c.b16 %v977, %v975
      %v998 = vpack.c.b16 %v978, %v976
      %v999 = vpack.c.b16 %v981, %v979
      %v1000 = vpack.c.b16 %v982, %v980
      %v1001 = vpack.c.b16 %v985, %v983
      %v1002 = vpack.c.b16 %v986, %v984
      %1019 = vmatpush.bf16.msra.mxu0 %v1001
      %1020 = vmatpush.bf16.msra.mxu0 %v999
      %1021 = vmatpush.bf16.msra.mxu0 %v997
      %1022 = vmatpush.bf16.msra.mxu0 %v995
      %1023 = vmatpush.bf16.msra.mxu0 %v993
      %1024 = vmatpush.bf16.msra.mxu0 %v991
      %1025 = vmatpush.bf16.msra.mxu0 %v989
      %1026 = vmatpush.bf16.msra.mxu0 %v987
      %1027 = vmatmul.bf16.gmra.mxu0 %v937
      %v1028 = vpop.f32.mrf.mxu0
      %v1029 = vadd.f32 %v926, %v1028
      %v1030 = vpop.f32.mrf.mxu0
      %v1031 = vadd.f32 %v931, %v1030
      %1032 = vdwg.mxu0
      %1033 = vmatpush.bf16.msra.mxu0 %v1002
      %1034 = vmatpush.bf16.msra.mxu0 %v1000
      %1035 = vmatpush.bf16.msra.mxu0 %v998
      %1036 = vmatpush.bf16.msra.mxu0 %v996
      %1037 = vmatpush.bf16.msra.mxu0 %v994
      %1038 = vmatpush.bf16.msra.mxu0 %v992
      %1039 = vmatpush.bf16.msra.mxu0 %v990
      %1040 = vmatpush.bf16.msra.mxu0 %v988
      %1041 = vmatmul.bf16.gmra.mxu0 %v937
      %v1042 = vpop.f32.mrf.mxu0
      %v1043 = vadd.f32 %v926, %v1042
      %v1044 = vpop.f32.mrf.mxu0
      %v1045 = vadd.f32 %v931, %v1044
      %1046 = vdwg.mxu0
      %v1047 = vld [vmem:[#allocation2] sm:$0xf]
      %v1048 = vld [vmem:[#allocation2 + $0x4] sm:$0xf]
      %v1049 = vld [vmem:[#allocation2 + $0x8] sm:$0xf]
      %v1050 = vld [vmem:[#allocation2 + $0xc] sm:$0xf]
      %v1051 = vld [vmem:[#allocation2 + $0x10] sm:$0xf]
      %v1052 = vld [vmem:[#allocation2 + $0x14] sm:$0xf]
      %v1053 = vld [vmem:[#allocation2 + $0x18] sm:$0xf]
      %v1054 = vld [vmem:[#allocation2 + $0x1c] sm:$0xf]
      %v1055 = vld [vmem:[#allocation2 + $0x20] sm:$0xf]
      %v1056 = vld [vmem:[#allocation2 + $0x24] sm:$0xf]
      %v1057 = vld [vmem:[#allocation2 + $0x28] sm:$0xf]
      %v1058 = vld [vmem:[#allocation2 + $0x2c] sm:$0xf]
      %v1059 = vld [vmem:[#allocation2 + $0x30] sm:$0xf]
      %v1060 = vld [vmem:[#allocation2 + $0x34] sm:$0xf]
      %v1061 = vld [vmem:[#allocation2 + $0x38] sm:$0xf]
      %v1062 = vld [vmem:[#allocation2 + $0x3c] sm:$0xf]
      %v1063 = vld [vmem:[#allocation2 + $0x40] sm:$0xf]
      %v1064 = vld [vmem:[#allocation2 + $0x44] sm:$0xf]
      %v1065 = vld [vmem:[#allocation2 + $0x48] sm:$0xf]
      %v1066 = vld [vmem:[#allocation2 + $0x4c] sm:$0xf]
      %v1067 = vld [vmem:[#allocation2 + $0x50] sm:$0xf]
      %v1068 = vld [vmem:[#allocation2 + $0x54] sm:$0xf]
      %v1069 = vld [vmem:[#allocation2 + $0x58] sm:$0xf]
      %v1070 = vld [vmem:[#allocation2 + $0x5c] sm:$0xf]
      %v1071 = vld [vmem:[#allocation2 + $0x60] sm:$0xf]
      %v1072 = vld [vmem:[#allocation2 + $0x64] sm:$0xf]
      %v1073 = vld [vmem:[#allocation2 + $0x68] sm:$0xf]
      %v1074 = vld [vmem:[#allocation2 + $0x6c] sm:$0xf]
      %v1075 = vld [vmem:[#allocation2 + $0x70] sm:$0xf]
      %v1076 = vld [vmem:[#allocation2 + $0x74] sm:$0xf]
      %v1077 = vld [vmem:[#allocation2 + $0x78] sm:$0xf]
      %v1078 = vld [vmem:[#allocation2 + $0x7c] sm:$0xf]
      %v1079 = vpack.c.bf16 %v1031, %v1029
      %v1080 = vpack.c.bf16 %v1045, %v1043
      %v1113 = vunpack.c.l.b16 %v1047
      %v1114 = vunpack.c.l.b16 %v1048
      %v1115 = vunpack.c.l.b16 %v1049
      %v1116 = vunpack.c.l.b16 %v1050
      %v1117 = vunpack.c.l.b16 %v1051
      %v1118 = vunpack.c.l.b16 %v1052
      %v1119 = vunpack.c.l.b16 %v1053
      %v1120 = vunpack.c.l.b16 %v1054
      %v1121 = vunpack.c.l.b16 %v1055
      %v1122 = vunpack.c.l.b16 %v1056
      %v1123 = vunpack.c.l.b16 %v1057
      %v1124 = vunpack.c.l.b16 %v1058
      %v1125 = vunpack.c.l.b16 %v1059
      %v1126 = vunpack.c.l.b16 %v1060
      %v1127 = vunpack.c.l.b16 %v1061
      %v1128 = vunpack.c.l.b16 %v1062
      %v1129 = vunpack.c.l.b16 %v1063
      %v1130 = vunpack.c.l.b16 %v1064
      %v1131 = vunpack.c.l.b16 %v1065
      %v1132 = vunpack.c.l.b16 %v1066
      %v1133 = vunpack.c.l.b16 %v1067
      %v1134 = vunpack.c.l.b16 %v1068
      %v1135 = vunpack.c.l.b16 %v1069
      %v1136 = vunpack.c.l.b16 %v1070
      %v1137 = vunpack.c.l.b16 %v1071
      %v1138 = vunpack.c.l.b16 %v1072
      %v1139 = vunpack.c.l.b16 %v1073
      %v1140 = vunpack.c.l.b16 %v1074
      %v1141 = vunpack.c.l.b16 %v1075
      %v1142 = vunpack.c.l.b16 %v1076
      %v1143 = vunpack.c.l.b16 %v1077
      %v1144 = vunpack.c.l.b16 %v1078
      %v1145 = vpack.c.b16 %v1114, %v1113
      %v1146 = vpack.c.b16 %v1116, %v1115
      %v1147 = vpack.c.b16 %v1118, %v1117
      %v1148 = vpack.c.b16 %v1120, %v1119
      %v1149 = vpack.c.b16 %v1122, %v1121
      %v1150 = vpack.c.b16 %v1124, %v1123
      %v1151 = vpack.c.b16 %v1126, %v1125
      %v1152 = vpack.c.b16 %v1128, %v1127
      %v1153 = vpack.c.b16 %v1130, %v1129
      %v1154 = vpack.c.b16 %v1132, %v1131
      %v1155 = vpack.c.b16 %v1134, %v1133
      %v1156 = vpack.c.b16 %v1136, %v1135
      %v1157 = vpack.c.b16 %v1138, %v1137
      %v1158 = vpack.c.b16 %v1140, %v1139
      %v1159 = vpack.c.b16 %v1142, %v1141
      %v1160 = vpack.c.b16 %v1144, %v1143
      %vm1161 = vcmask 130048
      %v1163 = vsel %vm1161, %v1145, 0
      %v1166 = vsel %vm1161, %v1146, 0
      %v1169 = vsel %vm1161, %v1147, 0
      %v1172 = vsel %vm1161, %v1148, 0
      %v1175 = vsel %vm1161, %v1149, 0
      %v1178 = vsel %vm1161, %v1150, 0
      %v1181 = vsel %vm1161, %v1151, 0
      %v1184 = vsel %vm1161, %v1152, 0
      %v1187 = vsel %vm1161, %v1153, 0
      %v1190 = vsel %vm1161, %v1154, 0
      %v1193 = vsel %vm1161, %v1155, 0
      %v1196 = vsel %vm1161, %v1156, 0
      %v1199 = vsel %vm1161, %v1157, 0
      %v1202 = vsel %vm1161, %v1158, 0
      %v1205 = vsel %vm1161, %v1159, 0
      %v1208 = vsel %vm1161, %v1160, 0
      %1210 = vmatpush.bf16.msra.mxu0 0
      %1211 = vmatpush.bf16.msra.mxu0 0
      %1212 = vmatpush.bf16.msra.mxu0 0
      %1213 = vmatpush.bf16.msra.mxu0 0
      %1214 = vmatpush.bf16.msra.mxu0 0
      %1215 = vmatpush.bf16.msra.mxu0 0
      %1216 = vmatpush.bf16.msra.mxu0 0
      %1217 = vmatpush.bf16.msra.mxu0 %v1079
      %1218 = vmatmul.bf16.gmra.mxu0 %v1163
      %v1219 = vpop.f32.mrf.mxu0
      %v1220 = vadd.f32 0.0, %v1219
      %v1221 = vpop.f32.mrf.mxu0
      %v1222 = vadd.f32 0.0, %v1221
      %1223 = vmatmul.bf16.gmra.mxu0 %v1166
      %v1224 = vpop.f32.mrf.mxu0
      %v1225 = vadd.f32 0.0, %v1224
      %v1226 = vpop.f32.mrf.mxu0
      %v1227 = vadd.f32 0.0, %v1226
      %1228 = vmatmul.bf16.gmra.mxu0 %v1169
      %v1229 = vpop.f32.mrf.mxu0
      %v1230 = vadd.f32 0.0, %v1229
      %v1231 = vpop.f32.mrf.mxu0
      %v1232 = vadd.f32 0.0, %v1231
      %1233 = vmatmul.bf16.gmra.mxu0 %v1172
      %v1234 = vpop.f32.mrf.mxu0
      %v1235 = vadd.f32 0.0, %v1234
      %v1236 = vpop.f32.mrf.mxu0
      %v1237 = vadd.f32 0.0, %v1236
      %1238 = vmatmul.bf16.gmra.mxu0 %v1175
      %v1239 = vpop.f32.mrf.mxu0
      %v1240 = vadd.f32 0.0, %v1239
      %v1241 = vpop.f32.mrf.mxu0
      %v1242 = vadd.f32 0.0, %v1241
      %1243 = vmatmul.bf16.gmra.mxu0 %v1178
      %v1244 = vpop.f32.mrf.mxu0
      %v1245 = vadd.f32 0.0, %v1244
      %v1246 = vpop.f32.mrf.mxu0
      %v1247 = vadd.f32 0.0, %v1246
      %1248 = vmatmul.bf16.gmra.mxu0 %v1181
      %v1249 = vpop.f32.mrf.mxu0
      %v1250 = vadd.f32 0.0, %v1249
      %v1251 = vpop.f32.mrf.mxu0
      %v1252 = vadd.f32 0.0, %v1251
      %1253 = vmatmul.bf16.gmra.mxu0 %v1184
      %v1254 = vpop.f32.mrf.mxu0
      %v1255 = vadd.f32 0.0, %v1254
      %v1256 = vpop.f32.mrf.mxu0
      %v1257 = vadd.f32 0.0, %v1256
      %1258 = vmatmul.bf16.gmra.mxu0 %v1187
      %v1259 = vpop.f32.mrf.mxu0
      %v1260 = vadd.f32 0.0, %v1259
      %v1261 = vpop.f32.mrf.mxu0
      %v1262 = vadd.f32 0.0, %v1261
      %1263 = vmatmul.bf16.gmra.mxu0 %v1190
      %v1264 = vpop.f32.mrf.mxu0
      %v1265 = vadd.f32 0.0, %v1264
      %v1266 = vpop.f32.mrf.mxu0
      %v1267 = vadd.f32 0.0, %v1266
      %1268 = vmatmul.bf16.gmra.mxu0 %v1193
      %v1269 = vpop.f32.mrf.mxu0
      %v1270 = vadd.f32 0.0, %v1269
      %v1271 = vpop.f32.mrf.mxu0
      %v1272 = vadd.f32 0.0, %v1271
      %1273 = vmatmul.bf16.gmra.mxu0 %v1196
      %v1274 = vpop.f32.mrf.mxu0
      %v1275 = vadd.f32 0.0, %v1274
      %v1276 = vpop.f32.mrf.mxu0
      %v1277 = vadd.f32 0.0, %v1276
      %1278 = vmatmul.bf16.gmra.mxu0 %v1199
      %v1279 = vpop.f32.mrf.mxu0
      %v1280 = vadd.f32 0.0, %v1279
      %v1281 = vpop.f32.mrf.mxu0
      %v1282 = vadd.f32 0.0, %v1281
      %1283 = vmatmul.bf16.gmra.mxu0 %v1202
      %v1284 = vpop.f32.mrf.mxu0
      %v1285 = vadd.f32 0.0, %v1284
      %v1286 = vpop.f32.mrf.mxu0
      %v1287 = vadd.f32 0.0, %v1286
      %1288 = vmatmul.bf16.gmra.mxu0 %v1205
      %v1289 = vpop.f32.mrf.mxu0
      %v1290 = vadd.f32 0.0, %v1289
      %v1291 = vpop.f32.mrf.mxu0
      %v1292 = vadd.f32 0.0, %v1291
      %1293 = vmatmul.bf16.gmra.mxu0 %v1208
      %v1294 = vpop.f32.mrf.mxu0
      %v1295 = vadd.f32 0.0, %v1294
      %v1296 = vpop.f32.mrf.mxu0
      %v1297 = vadd.f32 0.0, %v1296
      %1298 = vdwg.mxu0
      %1299 = vmatpush.bf16.msra.mxu0 0
      %1300 = vmatpush.bf16.msra.mxu0 0
      %1301 = vmatpush.bf16.msra.mxu0 0
      %1302 = vmatpush.bf16.msra.mxu0 0
      %1303 = vmatpush.bf16.msra.mxu0 0
      %1304 = vmatpush.bf16.msra.mxu0 0
      %1305 = vmatpush.bf16.msra.mxu0 0
      %1306 = vmatpush.bf16.msra.mxu0 %v1080
      %1307 = vmatmul.bf16.gmra.mxu0 %v1163
      %v1308 = vpop.f32.mrf.mxu0
      %v1309 = vadd.f32 0.0, %v1308
      %v1310 = vpop.f32.mrf.mxu0
      %v1311 = vadd.f32 0.0, %v1310
      %1312 = vmatmul.bf16.gmra.mxu0 %v1166
      %v1313 = vpop.f32.mrf.mxu0
      %v1314 = vadd.f32 0.0, %v1313
      %v1315 = vpop.f32.mrf.mxu0
      %v1316 = vadd.f32 0.0, %v1315
      %1317 = vmatmul.bf16.gmra.mxu0 %v1169
      %v1318 = vpop.f32.mrf.mxu0
      %v1319 = vadd.f32 0.0, %v1318
      %v1320 = vpop.f32.mrf.mxu0
      %v1321 = vadd.f32 0.0, %v1320
      %1322 = vmatmul.bf16.gmra.mxu0 %v1172
      %v1323 = vpop.f32.mrf.mxu0
      %v1324 = vadd.f32 0.0, %v1323
      %v1325 = vpop.f32.mrf.mxu0
      %v1326 = vadd.f32 0.0, %v1325
      %1327 = vmatmul.bf16.gmra.mxu0 %v1175
      %v1328 = vpop.f32.mrf.mxu0
      %v1329 = vadd.f32 0.0, %v1328
      %v1330 = vpop.f32.mrf.mxu0
      %v1331 = vadd.f32 0.0, %v1330
      %1332 = vmatmul.bf16.gmra.mxu0 %v1178
      %v1333 = vpop.f32.mrf.mxu0
      %v1334 = vadd.f32 0.0, %v1333
      %v1335 = vpop.f32.mrf.mxu0
      %v1336 = vadd.f32 0.0, %v1335
      %1337 = vmatmul.bf16.gmra.mxu0 %v1181
      %v1338 = vpop.f32.mrf.mxu0
      %v1339 = vadd.f32 0.0, %v1338
      %v1340 = vpop.f32.mrf.mxu0
      %v1341 = vadd.f32 0.0, %v1340
      %1342 = vmatmul.bf16.gmra.mxu0 %v1184
      %v1343 = vpop.f32.mrf.mxu0
      %v1344 = vadd.f32 0.0, %v1343
      %v1345 = vpop.f32.mrf.mxu0
      %v1346 = vadd.f32 0.0, %v1345
      %1347 = vmatmul.bf16.gmra.mxu0 %v1187
      %v1348 = vpop.f32.mrf.mxu0
      %v1349 = vadd.f32 0.0, %v1348
      %v1350 = vpop.f32.mrf.mxu0
      %v1351 = vadd.f32 0.0, %v1350
      %1352 = vmatmul.bf16.gmra.mxu0 %v1190
      %v1353 = vpop.f32.mrf.mxu0
      %v1354 = vadd.f32 0.0, %v1353
      %v1355 = vpop.f32.mrf.mxu0
      %v1356 = vadd.f32 0.0, %v1355
      %1357 = vmatmul.bf16.gmra.mxu0 %v1193
      %v1358 = vpop.f32.mrf.mxu0
      %v1359 = vadd.f32 0.0, %v1358
      %v1360 = vpop.f32.mrf.mxu0
      %v1361 = vadd.f32 0.0, %v1360
      %1362 = vmatmul.bf16.gmra.mxu0 %v1196
      %v1363 = vpop.f32.mrf.mxu0
      %v1364 = vadd.f32 0.0, %v1363
      %v1365 = vpop.f32.mrf.mxu0
      %v1366 = vadd.f32 0.0, %v1365
      %1367 = vmatmul.bf16.gmra.mxu0 %v1199
      %v1368 = vpop.f32.mrf.mxu0
      %v1369 = vadd.f32 0.0, %v1368
      %v1370 = vpop.f32.mrf.mxu0
      %v1371 = vadd.f32 0.0, %v1370
      %1372 = vmatmul.bf16.gmra.mxu0 %v1202
      %v1373 = vpop.f32.mrf.mxu0
      %v1374 = vadd.f32 0.0, %v1373
      %v1375 = vpop.f32.mrf.mxu0
      %v1376 = vadd.f32 0.0, %v1375
      %1377 = vmatmul.bf16.gmra.mxu0 %v1205
      %v1378 = vpop.f32.mrf.mxu0
      %v1379 = vadd.f32 0.0, %v1378
      %v1380 = vpop.f32.mrf.mxu0
      %v1381 = vadd.f32 0.0, %v1380
      %1382 = vmatmul.bf16.gmra.mxu0 %v1208
      %v1383 = vpop.f32.mrf.mxu0
      %v1384 = vadd.f32 0.0, %v1383
      %v1385 = vpop.f32.mrf.mxu0
      %v1386 = vadd.f32 0.0, %v1385
      %1387 = vdwg.mxu0
      %v1388 = vmax.f32 %v1220, %v1225
      %v1389 = vmax.f32 %v1222, %v1227
      %v1390 = vmax.f32 %v1388, %v1230
      %v1391 = vmax.f32 %v1389, %v1232
      %v1392 = vmax.f32 %v1390, %v1235
      %v1393 = vmax.f32 %v1391, %v1237
      %v1394 = vmax.f32 %v1392, %v1240
      %v1395 = vmax.f32 %v1393, %v1242
      %v1396 = vmax.f32 %v1394, %v1245
      %v1397 = vmax.f32 %v1395, %v1247
      %v1398 = vmax.f32 %v1396, %v1250
      %v1399 = vmax.f32 %v1397, %v1252
      %v1400 = vmax.f32 %v1398, %v1255
      %v1401 = vmax.f32 %v1399, %v1257
      %v1402 = vmax.f32 %v1400, %v1260
      %v1403 = vmax.f32 %v1401, %v1262
      %v1404 = vmax.f32 %v1402, %v1265
      %v1405 = vmax.f32 %v1403, %v1267
      %v1406 = vmax.f32 %v1404, %v1270
      %v1407 = vmax.f32 %v1405, %v1272
      %v1408 = vmax.f32 %v1406, %v1275
      %v1409 = vmax.f32 %v1407, %v1277
      %v1410 = vmax.f32 %v1408, %v1280
      %v1411 = vmax.f32 %v1409, %v1282
      %v1412 = vmax.f32 %v1410, %v1285
      %v1413 = vmax.f32 %v1411, %v1287
      %v1414 = vmax.f32 %v1412, %v1290
      %v1415 = vmax.f32 %v1413, %v1292
      %v1416 = vmax.f32 %v1414, %v1295
      %v1417 = vmax.f32 %v1415, %v1297
      %v1418 = vmax.f32 %v1416, %v1417
      %v1419 = vrot.slane %v1418, 4
      %v1420 = vmax.f32 %v1418, %v1419
      %v1421 = vrot.slane %v1420, 2
      %v1422 = vmax.f32 %v1420, %v1421
      %v1423 = vrot.slane %v1422, 1
      %v1424 = vmax.f32 %v1422, %v1423
      %v1425 = vmax.f32 %v1309, %v1314
      %v1426 = vmax.f32 %v1311, %v1316
      %v1427 = vmax.f32 %v1425, %v1319
      %v1428 = vmax.f32 %v1426, %v1321
      %v1429 = vmax.f32 %v1427, %v1324
      %v1430 = vmax.f32 %v1428, %v1326
      %v1431 = vmax.f32 %v1429, %v1329
      %v1432 = vmax.f32 %v1430, %v1331
      %v1433 = vmax.f32 %v1431, %v1334
      %v1434 = vmax.f32 %v1432, %v1336
      %v1435 = vmax.f32 %v1433, %v1339
      %v1436 = vmax.f32 %v1434, %v1341
      %v1437 = vmax.f32 %v1435, %v1344
      %v1438 = vmax.f32 %v1436, %v1346
      %v1439 = vmax.f32 %v1437, %v1349
      %v1440 = vmax.f32 %v1438, %v1351
      %v1441 = vmax.f32 %v1439, %v1354
      %v1442 = vmax.f32 %v1440, %v1356
      %v1443 = vmax.f32 %v1441, %v1359
      %v1444 = vmax.f32 %v1442, %v1361
      %v1445 = vmax.f32 %v1443, %v1364
      %v1446 = vmax.f32 %v1444, %v1366
      %v1447 = vmax.f32 %v1445, %v1369
      %v1448 = vmax.f32 %v1446, %v1371
      %v1449 = vmax.f32 %v1447, %v1374
      %v1450 = vmax.f32 %v1448, %v1376
      %v1451 = vmax.f32 %v1449, %v1379
      %v1452 = vmax.f32 %v1450, %v1381
      %v1453 = vmax.f32 %v1451, %v1384
      %v1454 = vmax.f32 %v1452, %v1386
      %v1455 = vmax.f32 %v1453, %v1454
      %v1456 = vrot.slane %v1455, 4
      %v1457 = vmax.f32 %v1455, %v1456
      %v1458 = vrot.slane %v1457, 2
      %v1459 = vmax.f32 %v1457, %v1458
      %v1460 = vrot.slane %v1459, 1
      %v1461 = vmax.f32 %v1459, %v1460
      %v1462 = vsub.f32 %v1220, %v1424
      %v1463 = vsub.f32 %v1309, %v1461
      %v1464 = vsub.f32 %v1222, %v1424
      %v1465 = vsub.f32 %v1311, %v1461
      %v1466 = vsub.f32 %v1225, %v1424
      %v1467 = vsub.f32 %v1314, %v1461
      %v1468 = vsub.f32 %v1227, %v1424
      %v1469 = vsub.f32 %v1316, %v1461
      %v1470 = vsub.f32 %v1230, %v1424
      %v1471 = vsub.f32 %v1319, %v1461
      %v1472 = vsub.f32 %v1232, %v1424
      %v1473 = vsub.f32 %v1321, %v1461
      %v1474 = vsub.f32 %v1235, %v1424
      %v1475 = vsub.f32 %v1324, %v1461
      %v1476 = vsub.f32 %v1237, %v1424
      %v1477 = vsub.f32 %v1326, %v1461
      %v1478 = vsub.f32 %v1240, %v1424
      %v1479 = vsub.f32 %v1329, %v1461
      %v1480 = vsub.f32 %v1242, %v1424
      %v1481 = vsub.f32 %v1331, %v1461
      %v1482 = vsub.f32 %v1245, %v1424
      %v1483 = vsub.f32 %v1334, %v1461
      %v1484 = vsub.f32 %v1247, %v1424
      %v1485 = vsub.f32 %v1336, %v1461
      %v1486 = vsub.f32 %v1250, %v1424
      %v1487 = vsub.f32 %v1339, %v1461
      %v1488 = vsub.f32 %v1252, %v1424
      %v1489 = vsub.f32 %v1341, %v1461
      %v1490 = vsub.f32 %v1255, %v1424
      %v1491 = vsub.f32 %v1344, %v1461
      %v1492 = vsub.f32 %v1257, %v1424
      %v1493 = vsub.f32 %v1346, %v1461
      %v1494 = vsub.f32 %v1260, %v1424
      %v1495 = vsub.f32 %v1349, %v1461
      %v1496 = vsub.f32 %v1262, %v1424
      %v1497 = vsub.f32 %v1351, %v1461
      %v1498 = vsub.f32 %v1265, %v1424
      %v1499 = vsub.f32 %v1354, %v1461
      %v1500 = vsub.f32 %v1267, %v1424
      %v1501 = vsub.f32 %v1356, %v1461
      %v1502 = vsub.f32 %v1270, %v1424
      %v1503 = vsub.f32 %v1359, %v1461
      %v1504 = vsub.f32 %v1272, %v1424
      %v1505 = vsub.f32 %v1361, %v1461
      %v1506 = vsub.f32 %v1275, %v1424
      %v1507 = vsub.f32 %v1364, %v1461
      %v1508 = vsub.f32 %v1277, %v1424
      %v1509 = vsub.f32 %v1366, %v1461
      %v1510 = vsub.f32 %v1280, %v1424
      %v1511 = vsub.f32 %v1369, %v1461
      %v1512 = vsub.f32 %v1282, %v1424
      %v1513 = vsub.f32 %v1371, %v1461
      %v1514 = vsub.f32 %v1285, %v1424
      %v1515 = vsub.f32 %v1374, %v1461
      %v1516 = vsub.f32 %v1287, %v1424
      %v1517 = vsub.f32 %v1376, %v1461
      %v1518 = vsub.f32 %v1290, %v1424
      %v1519 = vsub.f32 %v1379, %v1461
      %v1520 = vsub.f32 %v1292, %v1424
      %v1521 = vsub.f32 %v1381, %v1461
      %v1522 = vsub.f32 %v1295, %v1424
      %v1523 = vsub.f32 %v1384, %v1461
      %v1524 = vsub.f32 %v1297, %v1424
      %v1525 = vsub.f32 %v1386, %v1461
      %v1526 = vmul.f32 %v1462, 1.442695
      %v1527 = vpow.pop %v1526
      %v1528 = vmul.f32 %v1463, 1.442695
      %v1529 = vpow.pop %v1528
      %v1530 = vmul.f32 %v1464, 1.442695
      %v1531 = vpow.pop %v1530
      %v1532 = vmul.f32 %v1465, 1.442695
      %v1533 = vpow.pop %v1532
      %v1534 = vmul.f32 %v1466, 1.442695
      %v1535 = vpow.pop %v1534
      %v1536 = vmul.f32 %v1467, 1.442695
      %v1537 = vpow.pop %v1536
      %v1538 = vmul.f32 %v1468, 1.442695
      %v1539 = vpow.pop %v1538
      %v1540 = vmul.f32 %v1469, 1.442695
      %v1541 = vpow.pop %v1540
      %v1542 = vmul.f32 %v1470, 1.442695
      %v1543 = vpow.pop %v1542
      %v1544 = vmul.f32 %v1471, 1.442695
      %v1545 = vpow.pop %v1544
      %v1546 = vmul.f32 %v1472, 1.442695
      %v1547 = vpow.pop %v1546
      %v1548 = vmul.f32 %v1473, 1.442695
      %v1549 = vpow.pop %v1548
      %v1550 = vmul.f32 %v1474, 1.442695
      %v1551 = vpow.pop %v1550
      %v1552 = vmul.f32 %v1475, 1.442695
      %v1553 = vpow.pop %v1552
      %v1554 = vmul.f32 %v1476, 1.442695
      %v1555 = vpow.pop %v1554
      %v1556 = vmul.f32 %v1477, 1.442695
      %v1557 = vpow.pop %v1556
      %v1558 = vmul.f32 %v1478, 1.442695
      %v1559 = vpow.pop %v1558
      %v1560 = vmul.f32 %v1479, 1.442695
      %v1561 = vpow.pop %v1560
      %v1562 = vmul.f32 %v1480, 1.442695
      %v1563 = vpow.pop %v1562
      %v1564 = vmul.f32 %v1481, 1.442695
      %v1565 = vpow.pop %v1564
      %v1566 = vmul.f32 %v1482, 1.442695
      %v1567 = vpow.pop %v1566
      %v1568 = vmul.f32 %v1483, 1.442695
      %v1569 = vpow.pop %v1568
      %v1570 = vmul.f32 %v1484, 1.442695
      %v1571 = vpow.pop %v1570
      %v1572 = vmul.f32 %v1485, 1.442695
      %v1573 = vpow.pop %v1572
      %v1574 = vmul.f32 %v1486, 1.442695
      %v1575 = vpow.pop %v1574
      %v1576 = vmul.f32 %v1487, 1.442695
      %v1577 = vpow.pop %v1576
      %v1578 = vmul.f32 %v1488, 1.442695
      %v1579 = vpow.pop %v1578
      %v1580 = vmul.f32 %v1489, 1.442695
      %v1581 = vpow.pop %v1580
      %v1582 = vmul.f32 %v1490, 1.442695
      %v1583 = vpow.pop %v1582
      %v1584 = vmul.f32 %v1491, 1.442695
      %v1585 = vpow.pop %v1584
      %v1586 = vmul.f32 %v1492, 1.442695
      %v1587 = vpow.pop %v1586
      %v1588 = vmul.f32 %v1493, 1.442695
      %v1589 = vpow.pop %v1588
      %v1590 = vmul.f32 %v1494, 1.442695
      %v1591 = vpow.pop %v1590
      %v1592 = vmul.f32 %v1495, 1.442695
      %v1593 = vpow.pop %v1592
      %v1594 = vmul.f32 %v1496, 1.442695
      %v1595 = vpow.pop %v1594
      %v1596 = vmul.f32 %v1497, 1.442695
      %v1597 = vpow.pop %v1596
      %v1598 = vmul.f32 %v1498, 1.442695
      %v1599 = vpow.pop %v1598
      %v1600 = vmul.f32 %v1499, 1.442695
      %v1601 = vpow.pop %v1600
      %v1602 = vmul.f32 %v1500, 1.442695
      %v1603 = vpow.pop %v1602
      %v1604 = vmul.f32 %v1501, 1.442695
      %v1605 = vpow.pop %v1604
      %v1606 = vmul.f32 %v1502, 1.442695
      %v1607 = vpow.pop %v1606
      %v1608 = vmul.f32 %v1503, 1.442695
      %v1609 = vpow.pop %v1608
      %v1610 = vmul.f32 %v1504, 1.442695
      %v1611 = vpow.pop %v1610
      %v1612 = vmul.f32 %v1505, 1.442695
      %v1613 = vpow.pop %v1612
      %v1614 = vmul.f32 %v1506, 1.442695
      %v1615 = vpow.pop %v1614
      %v1616 = vmul.f32 %v1507, 1.442695
      %v1617 = vpow.pop %v1616
      %v1618 = vmul.f32 %v1508, 1.442695
      %v1619 = vpow.pop %v1618
      %v1620 = vmul.f32 %v1509, 1.442695
      %v1621 = vpow.pop %v1620
      %v1622 = vmul.f32 %v1510, 1.442695
      %v1623 = vpow.pop %v1622
      %v1624 = vmul.f32 %v1511, 1.442695
      %v1625 = vpow.pop %v1624
      %v1626 = vmul.f32 %v1512, 1.442695
      %v1627 = vpow.pop %v1626
      %v1628 = vmul.f32 %v1513, 1.442695
      %v1629 = vpow.pop %v1628
      %v1630 = vmul.f32 %v1514, 1.442695
      %v1631 = vpow.pop %v1630
      %v1632 = vmul.f32 %v1515, 1.442695
      %v1633 = vpow.pop %v1632
      %v1634 = vmul.f32 %v1516, 1.442695
      %v1635 = vpow.pop %v1634
      %v1636 = vmul.f32 %v1517, 1.442695
      %v1637 = vpow.pop %v1636
      %v1638 = vmul.f32 %v1518, 1.442695
      %v1639 = vpow.pop %v1638
      %v1640 = vmul.f32 %v1519, 1.442695
      %v1641 = vpow.pop %v1640
      %v1642 = vmul.f32 %v1520, 1.442695
      %v1643 = vpow.pop %v1642
      %v1644 = vmul.f32 %v1521, 1.442695
      %v1645 = vpow.pop %v1644
      %v1646 = vmul.f32 %v1522, 1.442695
      %v1647 = vpow.pop %v1646
      %v1648 = vmul.f32 %v1523, 1.442695
      %v1649 = vpow.pop %v1648
      %v1650 = vmul.f32 %v1524, 1.442695
      %v1651 = vpow.pop %v1650
      %v1652 = vmul.f32 %v1525, 1.442695
      %v1653 = vpow.pop %v1652
      %v1654 = vadd.f32 %v1527, %v1531
      %v1655 = vadd.f32 %v1654, %v1535
      %v1656 = vadd.f32 %v1655, %v1539
      %v1657 = vadd.f32 %v1656, %v1543
      %v1658 = vadd.f32 %v1657, %v1547
      %v1659 = vadd.f32 %v1658, %v1551
      %v1660 = vadd.f32 %v1659, %v1555
      %v1661 = vadd.f32 %v1660, %v1559
      %v1662 = vadd.f32 %v1661, %v1563
      %v1663 = vadd.f32 %v1662, %v1567
      %v1664 = vadd.f32 %v1663, %v1571
      %v1665 = vadd.f32 %v1664, %v1575
      %v1666 = vadd.f32 %v1665, %v1579
      %v1667 = vadd.f32 %v1666, %v1583
      %v1668 = vadd.f32 %v1667, %v1587
      %v1669 = vadd.f32 %v1668, %v1591
      %v1670 = vadd.f32 %v1669, %v1595
      %v1671 = vadd.f32 %v1670, %v1599
      %v1672 = vadd.f32 %v1671, %v1603
      %v1673 = vadd.f32 %v1672, %v1607
      %v1674 = vadd.f32 %v1673, %v1611
      %v1675 = vadd.f32 %v1674, %v1615
      %v1676 = vadd.f32 %v1675, %v1619
      %v1677 = vadd.f32 %v1676, %v1623
      %v1678 = vadd.f32 %v1677, %v1627
      %v1679 = vadd.f32 %v1678, %v1631
      %v1680 = vadd.f32 %v1679, %v1635
      %v1681 = vadd.f32 %v1680, %v1639
      %v1682 = vadd.f32 %v1681, %v1643
      %v1683 = vadd.f32 %v1682, %v1647
      %v1684 = vadd.f32 %v1683, %v1651
      %v1685 = vrot.slane %v1684, 4
      %v1686 = vadd.f32 %v1684, %v1685
      %v1687 = vrot.slane %v1686, 2
      %v1688 = vadd.f32 %v1686, %v1687
      %v1689 = vrot.slane %v1688, 1
      %v1690 = vadd.f32 %v1688, %v1689
      %v1691 = vadd.f32 %v1529, %v1533
      %v1692 = vadd.f32 %v1691, %v1537
      %v1693 = vadd.f32 %v1692, %v1541
      %v1694 = vadd.f32 %v1693, %v1545
      %v1695 = vadd.f32 %v1694, %v1549
      %v1696 = vadd.f32 %v1695, %v1553
      %v1697 = vadd.f32 %v1696, %v1557
      %v1698 = vadd.f32 %v1697, %v1561
      %v1699 = vadd.f32 %v1698, %v1565
      %v1700 = vadd.f32 %v1699, %v1569
      %v1701 = vadd.f32 %v1700, %v1573
      %v1702 = vadd.f32 %v1701, %v1577
      %v1703 = vadd.f32 %v1702, %v1581
      %v1704 = vadd.f32 %v1703, %v1585
      %v1705 = vadd.f32 %v1704, %v1589
      %v1706 = vadd.f32 %v1705, %v1593
      %v1707 = vadd.f32 %v1706, %v1597
      %v1708 = vadd.f32 %v1707, %v1601
      %v1709 = vadd.f32 %v1708, %v1605
      %v1710 = vadd.f32 %v1709, %v1609
      %v1711 = vadd.f32 %v1710, %v1613
      %v1712 = vadd.f32 %v1711, %v1617
      %v1713 = vadd.f32 %v1712, %v1621
      %v1714 = vadd.f32 %v1713, %v1625
      %v1715 = vadd.f32 %v1714, %v1629
      %v1716 = vadd.f32 %v1715, %v1633
      %v1717 = vadd.f32 %v1716, %v1637
      %v1718 = vadd.f32 %v1717, %v1641
      %v1719 = vadd.f32 %v1718, %v1645
      %v1720 = vadd.f32 %v1719, %v1649
      %v1721 = vadd.f32 %v1720, %v1653
      %v1722 = vrot.slane %v1721, 4
      %v1723 = vadd.f32 %v1721, %v1722
      %v1724 = vrot.slane %v1723, 2
      %v1725 = vadd.f32 %v1723, %v1724
      %v1726 = vrot.slane %v1725, 1
      %v1727 = vadd.f32 %v1725, %v1726
      %v1728 = vld [vmem:[#allocation3] sm:$0xff]
      %v1729 = vld [vmem:[#allocation3 + $0x8] sm:$0xff]
      %v1730 = vld [vmem:[#allocation3 + $0x10] sm:$0xff]
      %v1731 = vld [vmem:[#allocation3 + $0x18] sm:$0xff]
      %v1732 = vld [vmem:[#allocation3 + $0x20] sm:$0xff]
      %v1733 = vld [vmem:[#allocation3 + $0x28] sm:$0xff]
      %v1734 = vld [vmem:[#allocation3 + $0x30] sm:$0xff]
      %v1735 = vld [vmem:[#allocation3 + $0x38] sm:$0xff]
      %v1736 = vld [vmem:[#allocation3 + $0x40] sm:$0xff]
      %v1737 = vld [vmem:[#allocation3 + $0x48] sm:$0xff]
      %v1738 = vld [vmem:[#allocation3 + $0x50] sm:$0xff]
      %v1739 = vld [vmem:[#allocation3 + $0x58] sm:$0xff]
      %v1740 = vld [vmem:[#allocation3 + $0x60] sm:$0xff]
      %v1741 = vld [vmem:[#allocation3 + $0x68] sm:$0xff]
      %v1742 = vld [vmem:[#allocation3 + $0x70] sm:$0xff]
      %v1743 = vld [vmem:[#allocation3 + $0x78] sm:$0xff]
      %v1744 = vpack.c.bf16 %v1531, %v1527
      %v1745 = vpack.c.bf16 %v1533, %v1529
      %v1746 = vpack.c.bf16 %v1539, %v1535
      %v1747 = vpack.c.bf16 %v1541, %v1537
      %v1748 = vpack.c.bf16 %v1547, %v1543
      %v1749 = vpack.c.bf16 %v1549, %v1545
      %v1750 = vpack.c.bf16 %v1555, %v1551
      %v1751 = vpack.c.bf16 %v1557, %v1553
      %v1752 = vpack.c.bf16 %v1563, %v1559
      %v1753 = vpack.c.bf16 %v1565, %v1561
      %v1754 = vpack.c.bf16 %v1571, %v1567
      %v1755 = vpack.c.bf16 %v1573, %v1569
      %v1756 = vpack.c.bf16 %v1579, %v1575
      %v1757 = vpack.c.bf16 %v1581, %v1577
      %v1758 = vpack.c.bf16 %v1587, %v1583
      %v1759 = vpack.c.bf16 %v1589, %v1585
      %v1760 = vpack.c.bf16 %v1595, %v1591
      %v1761 = vpack.c.bf16 %v1597, %v1593
      %v1762 = vpack.c.bf16 %v1603, %v1599
      %v1763 = vpack.c.bf16 %v1605, %v1601
      %v1764 = vpack.c.bf16 %v1611, %v1607
      %v1765 = vpack.c.bf16 %v1613, %v1609
      %v1766 = vpack.c.bf16 %v1619, %v1615
      %v1767 = vpack.c.bf16 %v1621, %v1617
      %v1768 = vpack.c.bf16 %v1627, %v1623
      %v1769 = vpack.c.bf16 %v1629, %v1625
      %v1770 = vpack.c.bf16 %v1635, %v1631
      %v1771 = vpack.c.bf16 %v1637, %v1633
      %v1772 = vpack.c.bf16 %v1643, %v1639
      %v1773 = vpack.c.bf16 %v1645, %v1641
      %v1774 = vpack.c.bf16 %v1651, %v1647
      %v1775 = vpack.c.bf16 %v1653, %v1649
      %v1792 = vunpack.c.l.b16 %v1728
      %v1793 = vunpack.c.h.b16 %v1728
      %v1794 = vunpack.c.l.b16 %v1729
      %v1795 = vunpack.c.h.b16 %v1729
      %v1796 = vunpack.c.l.b16 %v1730
      %v1797 = vunpack.c.h.b16 %v1730
      %v1798 = vunpack.c.l.b16 %v1731
      %v1799 = vunpack.c.h.b16 %v1731
      %v1800 = vunpack.c.l.b16 %v1732
      %v1801 = vunpack.c.h.b16 %v1732
      %v1802 = vunpack.c.l.b16 %v1733
      %v1803 = vunpack.c.h.b16 %v1733
      %v1804 = vunpack.c.l.b16 %v1734
      %v1805 = vunpack.c.h.b16 %v1734
      %v1806 = vunpack.c.l.b16 %v1735
      %v1807 = vunpack.c.h.b16 %v1735
      %v1808 = vunpack.c.l.b16 %v1736
      %v1809 = vunpack.c.h.b16 %v1736
      %v1810 = vunpack.c.l.b16 %v1737
      %v1811 = vunpack.c.h.b16 %v1737
      %v1812 = vunpack.c.l.b16 %v1738
      %v1813 = vunpack.c.h.b16 %v1738
      %v1814 = vunpack.c.l.b16 %v1739
      %v1815 = vunpack.c.h.b16 %v1739
      %v1816 = vunpack.c.l.b16 %v1740
      %v1817 = vunpack.c.h.b16 %v1740
      %v1818 = vunpack.c.l.b16 %v1741
      %v1819 = vunpack.c.h.b16 %v1741
      %v1820 = vunpack.c.l.b16 %v1742
      %v1821 = vunpack.c.h.b16 %v1742
      %v1822 = vunpack.c.l.b16 %v1743
      %v1823 = vunpack.c.h.b16 %v1743
      %v1824 = vpack.c.b16 %v1794, %v1792
      %v1825 = vpack.c.b16 %v1795, %v1793
      %v1826 = vpack.c.b16 %v1798, %v1796
      %v1827 = vpack.c.b16 %v1799, %v1797
      %v1828 = vpack.c.b16 %v1802, %v1800
      %v1829 = vpack.c.b16 %v1803, %v1801
      %v1830 = vpack.c.b16 %v1806, %v1804
      %v1831 = vpack.c.b16 %v1807, %v1805
      %v1832 = vpack.c.b16 %v1810, %v1808
      %v1833 = vpack.c.b16 %v1811, %v1809
      %v1834 = vpack.c.b16 %v1814, %v1812
      %v1835 = vpack.c.b16 %v1815, %v1813
      %v1836 = vpack.c.b16 %v1818, %v1816
      %v1837 = vpack.c.b16 %v1819, %v1817
      %v1838 = vpack.c.b16 %v1822, %v1820
      %v1839 = vpack.c.b16 %v1823, %v1821
      %1856 = vmatpush.bf16.msra.mxu0 %v1758
      %1857 = vmatpush.bf16.msra.mxu0 %v1756
      %1858 = vmatpush.bf16.msra.mxu0 %v1754
      %1859 = vmatpush.bf16.msra.mxu0 %v1752
      %1860 = vmatpush.bf16.msra.mxu0 %v1750
      %1861 = vmatpush.bf16.msra.mxu0 %v1748
      %1862 = vmatpush.bf16.msra.mxu0 %v1746
      %1863 = vmatpush.bf16.msra.mxu0 %v1744
      %1864 = vmatmul.bf16.gmra.mxu0 %v1824
      %v1865 = vpop.f32.mrf.mxu0
      %v1866 = vadd.f32 0.0, %v1865
      %v1867 = vpop.f32.mrf.mxu0
      %v1868 = vadd.f32 0.0, %v1867
      %1869 = vmatmul.bf16.gmra.mxu0 %v1826
      %v1870 = vpop.f32.mrf.mxu0
      %v1871 = vadd.f32 0.0, %v1870
      %v1872 = vpop.f32.mrf.mxu0
      %v1873 = vadd.f32 0.0, %v1872
      %1874 = vmatmul.bf16.gmra.mxu0 %v1828
      %v1875 = vpop.f32.mrf.mxu0
      %v1876 = vadd.f32 0.0, %v1875
      %v1877 = vpop.f32.mrf.mxu0
      %v1878 = vadd.f32 0.0, %v1877
      %1879 = vmatmul.bf16.gmra.mxu0 %v1830
      %v1880 = vpop.f32.mrf.mxu0
      %v1881 = vadd.f32 0.0, %v1880
      %v1882 = vpop.f32.mrf.mxu0
      %v1883 = vadd.f32 0.0, %v1882
      %1884 = vmatmul.bf16.gmra.mxu0 %v1832
      %v1885 = vpop.f32.mrf.mxu0
      %v1886 = vadd.f32 0.0, %v1885
      %v1887 = vpop.f32.mrf.mxu0
      %v1888 = vadd.f32 0.0, %v1887
      %1889 = vmatmul.bf16.gmra.mxu0 %v1834
      %v1890 = vpop.f32.mrf.mxu0
      %v1891 = vadd.f32 0.0, %v1890
      %v1892 = vpop.f32.mrf.mxu0
      %v1893 = vadd.f32 0.0, %v1892
      %1894 = vmatmul.bf16.gmra.mxu0 %v1836
      %v1895 = vpop.f32.mrf.mxu0
      %v1896 = vadd.f32 0.0, %v1895
      %v1897 = vpop.f32.mrf.mxu0
      %v1898 = vadd.f32 0.0, %v1897
      %1899 = vmatmul.bf16.gmra.mxu0 %v1838
      %v1900 = vpop.f32.mrf.mxu0
      %v1901 = vadd.f32 0.0, %v1900
      %v1902 = vpop.f32.mrf.mxu0
      %v1903 = vadd.f32 0.0, %v1902
      %1904 = vdwg.mxu0
      %1905 = vmatpush.bf16.msra.mxu0 %v1774
      %1906 = vmatpush.bf16.msra.mxu0 %v1772
      %1907 = vmatpush.bf16.msra.mxu0 %v1770
      %1908 = vmatpush.bf16.msra.mxu0 %v1768
      %1909 = vmatpush.bf16.msra.mxu0 %v1766
      %1910 = vmatpush.bf16.msra.mxu0 %v1764
      %1911 = vmatpush.bf16.msra.mxu0 %v1762
      %1912 = vmatpush.bf16.msra.mxu0 %v1760
      %1913 = vmatmul.bf16.gmra.mxu0 %v1825
      %v1914 = vpop.f32.mrf.mxu0
      %v1915 = vadd.f32 %v1866, %v1914
      %v1916 = vpop.f32.mrf.mxu0
      %v1917 = vadd.f32 %v1868, %v1916
      %1918 = vmatmul.bf16.gmra.mxu0 %v1827
      %v1919 = vpop.f32.mrf.mxu0
      %v1920 = vadd.f32 %v1871, %v1919
      %v1921 = vpop.f32.mrf.mxu0
      %v1922 = vadd.f32 %v1873, %v1921
      %1923 = vmatmul.bf16.gmra.mxu0 %v1829
      %v1924 = vpop.f32.mrf.mxu0
      %v1925 = vadd.f32 %v1876, %v1924
      %v1926 = vpop.f32.mrf.mxu0
      %v1927 = vadd.f32 %v1878, %v1926
      %1928 = vmatmul.bf16.gmra.mxu0 %v1831
      %v1929 = vpop.f32.mrf.mxu0
      %v1930 = vadd.f32 %v1881, %v1929
      %v1931 = vpop.f32.mrf.mxu0
      %v1932 = vadd.f32 %v1883, %v1931
      %1933 = vmatmul.bf16.gmra.mxu0 %v1833
      %v1934 = vpop.f32.mrf.mxu0
      %v1935 = vadd.f32 %v1886, %v1934
      %v1936 = vpop.f32.mrf.mxu0
      %v1937 = vadd.f32 %v1888, %v1936
      %1938 = vmatmul.bf16.gmra.mxu0 %v1835
      %v1939 = vpop.f32.mrf.mxu0
      %v1940 = vadd.f32 %v1891, %v1939
      %v1941 = vpop.f32.mrf.mxu0
      %v1942 = vadd.f32 %v1893, %v1941
      %1943 = vmatmul.bf16.gmra.mxu0 %v1837
      %v1944 = vpop.f32.mrf.mxu0
      %v1945 = vadd.f32 %v1896, %v1944
      %v1946 = vpop.f32.mrf.mxu0
      %v1947 = vadd.f32 %v1898, %v1946
      %1948 = vmatmul.bf16.gmra.mxu0 %v1839
      %v1949 = vpop.f32.mrf.mxu0
      %v1950 = vadd.f32 %v1901, %v1949
      %v1951 = vpop.f32.mrf.mxu0
      %v1952 = vadd.f32 %v1903, %v1951
      %1953 = vdwg.mxu0
      %1954 = vmatpush.bf16.msra.mxu0 %v1759
      %1955 = vmatpush.bf16.msra.mxu0 %v1757
      %1956 = vmatpush.bf16.msra.mxu0 %v1755
      %1957 = vmatpush.bf16.msra.mxu0 %v1753
      %1958 = vmatpush.bf16.msra.mxu0 %v1751
      %1959 = vmatpush.bf16.msra.mxu0 %v1749
      %1960 = vmatpush.bf16.msra.mxu0 %v1747
      %1961 = vmatpush.bf16.msra.mxu0 %v1745
      %1962 = vmatmul.bf16.gmra.mxu0 %v1824
      %v1963 = vpop.f32.mrf.mxu0
      %v1964 = vadd.f32 0.0, %v1963
      %v1965 = vpop.f32.mrf.mxu0
      %v1966 = vadd.f32 0.0, %v1965
      %1967 = vmatmul.bf16.gmra.mxu0 %v1826
      %v1968 = vpop.f32.mrf.mxu0
      %v1969 = vadd.f32 0.0, %v1968
      %v1970 = vpop.f32.mrf.mxu0
      %v1971 = vadd.f32 0.0, %v1970
      %1972 = vmatmul.bf16.gmra.mxu0 %v1828
      %v1973 = vpop.f32.mrf.mxu0
      %v1974 = vadd.f32 0.0, %v1973
      %v1975 = vpop.f32.mrf.mxu0
      %v1976 = vadd.f32 0.0, %v1975
      %1977 = vmatmul.bf16.gmra.mxu0 %v1830
      %v1978 = vpop.f32.mrf.mxu0
      %v1979 = vadd.f32 0.0, %v1978
      %v1980 = vpop.f32.mrf.mxu0
      %v1981 = vadd.f32 0.0, %v1980
      %1982 = vmatmul.bf16.gmra.mxu0 %v1832
      %v1983 = vpop.f32.mrf.mxu0
      %v1984 = vadd.f32 0.0, %v1983
      %v1985 = vpop.f32.mrf.mxu0
      %v1986 = vadd.f32 0.0, %v1985
      %1987 = vmatmul.bf16.gmra.mxu0 %v1834
      %v1988 = vpop.f32.mrf.mxu0
      %v1989 = vadd.f32 0.0, %v1988
      %v1990 = vpop.f32.mrf.mxu0
      %v1991 = vadd.f32 0.0, %v1990
      %1992 = vmatmul.bf16.gmra.mxu0 %v1836
      %v1993 = vpop.f32.mrf.mxu0
      %v1994 = vadd.f32 0.0, %v1993
      %v1995 = vpop.f32.mrf.mxu0
      %v1996 = vadd.f32 0.0, %v1995
      %1997 = vmatmul.bf16.gmra.mxu0 %v1838
      %v1998 = vpop.f32.mrf.mxu0
      %v1999 = vadd.f32 0.0, %v1998
      %v2000 = vpop.f32.mrf.mxu0
      %v2001 = vadd.f32 0.0, %v2000
      %2002 = vdwg.mxu0
      %2003 = vmatpush.bf16.msra.mxu0 %v1775
      %2004 = vmatpush.bf16.msra.mxu0 %v1773
      %2005 = vmatpush.bf16.msra.mxu0 %v1771
      %2006 = vmatpush.bf16.msra.mxu0 %v1769
      %2007 = vmatpush.bf16.msra.mxu0 %v1767
      %2008 = vmatpush.bf16.msra.mxu0 %v1765
      %2009 = vmatpush.bf16.msra.mxu0 %v1763
      %2010 = vmatpush.bf16.msra.mxu0 %v1761
      %2011 = vmatmul.bf16.gmra.mxu0 %v1825
      %v2012 = vpop.f32.mrf.mxu0
      %v2013 = vadd.f32 %v1964, %v2012
      %v2014 = vpop.f32.mrf.mxu0
      %v2015 = vadd.f32 %v1966, %v2014
      %2016 = vmatmul.bf16.gmra.mxu0 %v1827
      %v2017 = vpop.f32.mrf.mxu0
      %v2018 = vadd.f32 %v1969, %v2017
      %v2019 = vpop.f32.mrf.mxu0
      %v2020 = vadd.f32 %v1971, %v2019
      %2021 = vmatmul.bf16.gmra.mxu0 %v1829
      %v2022 = vpop.f32.mrf.mxu0
      %v2023 = vadd.f32 %v1974, %v2022
      %v2024 = vpop.f32.mrf.mxu0
      %v2025 = vadd.f32 %v1976, %v2024
      %2026 = vmatmul.bf16.gmra.mxu0 %v1831
      %v2027 = vpop.f32.mrf.mxu0
      %v2028 = vadd.f32 %v1979, %v2027
      %v2029 = vpop.f32.mrf.mxu0
      %v2030 = vadd.f32 %v1981, %v2029
      %2031 = vmatmul.bf16.gmra.mxu0 %v1833
      %v2032 = vpop.f32.mrf.mxu0
      %v2033 = vadd.f32 %v1984, %v2032
      %v2034 = vpop.f32.mrf.mxu0
      %v2035 = vadd.f32 %v1986, %v2034
      %2036 = vmatmul.bf16.gmra.mxu0 %v1835
      %v2037 = vpop.f32.mrf.mxu0
      %v2038 = vadd.f32 %v1989, %v2037
      %v2039 = vpop.f32.mrf.mxu0
      %v2040 = vadd.f32 %v1991, %v2039
      %2041 = vmatmul.bf16.gmra.mxu0 %v1837
      %v2042 = vpop.f32.mrf.mxu0
      %v2043 = vadd.f32 %v1994, %v2042
      %v2044 = vpop.f32.mrf.mxu0
      %v2045 = vadd.f32 %v1996, %v2044
      %2046 = vmatmul.bf16.gmra.mxu0 %v1839
      %v2047 = vpop.f32.mrf.mxu0
      %v2048 = vadd.f32 %v1999, %v2047
      %v2049 = vpop.f32.mrf.mxu0
      %v2050 = vadd.f32 %v2001, %v2049
      %2051 = vdwg.mxu0
      %s2052 = sld [smem:[#allocation4]]
      %v2053 = vrcp.pop %v1690
      %v2054 = vrcp.pop %v1727
      %v2055 = vstv %s2052
      %v2056 = vmul.f32 %v2055, %v2053
      %v2057 = vmul.f32 %v2055, %v2054
      %v2058 = vmul.f32 %v2056, %v1915
      %v2059 = vmul.f32 %v2057, %v2013
      %v2060 = vmul.f32 %v2056, %v1917
      %v2061 = vmul.f32 %v2057, %v2015
      %v2062 = vmul.f32 %v2056, %v1920
      %v2063 = vmul.f32 %v2057, %v2018
      %v2064 = vmul.f32 %v2056, %v1922
      %v2065 = vmul.f32 %v2057, %v2020
      %v2066 = vmul.f32 %v2056, %v1925
      %v2067 = vmul.f32 %v2057, %v2023
      %v2068 = vmul.f32 %v2056, %v1927
      %v2069 = vmul.f32 %v2057, %v2025
      %v2070 = vmul.f32 %v2056, %v1930
      %v2071 = vmul.f32 %v2057, %v2028
      %v2072 = vmul.f32 %v2056, %v1932
      %v2073 = vmul.f32 %v2057, %v2030
      %v2074 = vmul.f32 %v2056, %v1935
      %v2075 = vmul.f32 %v2057, %v2033
      %v2076 = vmul.f32 %v2056, %v1937
      %v2077 = vmul.f32 %v2057, %v2035
      %v2078 = vmul.f32 %v2056, %v1940
      %v2079 = vmul.f32 %v2057, %v2038
      %v2080 = vmul.f32 %v2056, %v1942
      %v2081 = vmul.f32 %v2057, %v2040
      %v2082 = vmul.f32 %v2056, %v1945
      %v2083 = vmul.f32 %v2057, %v2043
      %v2084 = vmul.f32 %v2056, %v1947
      %v2085 = vmul.f32 %v2057, %v2045
      %v2086 = vmul.f32 %v2056, %v1950
      %v2087 = vmul.f32 %v2057, %v2048
      %v2088 = vmul.f32 %v2056, %v1952
      %v2089 = vmul.f32 %v2057, %v2050
      %v2090 = vunpack.c.l.bf16 %v903
      %v2091 = vunpack.c.h.bf16 %v903
      %v2092 = vunpack.c.l.bf16 %v904
      %v2093 = vunpack.c.h.bf16 %v904
      %v2094 = vunpack.c.l.bf16 %v905
      %v2095 = vunpack.c.h.bf16 %v905
      %v2096 = vunpack.c.l.bf16 %v906
      %v2097 = vunpack.c.h.bf16 %v906
      %v2098 = vunpack.c.l.bf16 %v907
      %v2099 = vunpack.c.h.bf16 %v907
      %v2100 = vunpack.c.l.bf16 %v908
      %v2101 = vunpack.c.h.bf16 %v908
      %v2102 = vunpack.c.l.bf16 %v909
      %v2103 = vunpack.c.h.bf16 %v909
      %v2104 = vunpack.c.l.bf16 %v910
      %v2105 = vunpack.c.h.bf16 %v910
      %v2106 = vunpack.c.l.bf16 %v911
      %v2107 = vunpack.c.h.bf16 %v911
      %v2108 = vunpack.c.l.bf16 %v912
      %v2109 = vunpack.c.h.bf16 %v912
      %v2110 = vunpack.c.l.bf16 %v913
      %v2111 = vunpack.c.h.bf16 %v913
      %v2112 = vunpack.c.l.bf16 %v914
      %v2113 = vunpack.c.h.bf16 %v914
      %v2114 = vunpack.c.l.bf16 %v915
      %v2115 = vunpack.c.h.bf16 %v915
      %v2116 = vunpack.c.l.bf16 %v916
      %v2117 = vunpack.c.h.bf16 %v916
      %v2118 = vunpack.c.l.bf16 %v917
      %v2119 = vunpack.c.h.bf16 %v917
      %v2120 = vunpack.c.l.bf16 %v918
      %v2121 = vunpack.c.h.bf16 %v918
      %v2122 = vadd.f32 %v2058, %v2090
      %v2123 = vadd.f32 %v2059, %v2091
      %v2124 = vadd.f32 %v2060, %v2092
      %v2125 = vadd.f32 %v2061, %v2093
      %v2126 = vadd.f32 %v2062, %v2094
      %v2127 = vadd.f32 %v2063, %v2095
      %v2128 = vadd.f32 %v2064, %v2096
      %v2129 = vadd.f32 %v2065, %v2097
      %v2130 = vadd.f32 %v2066, %v2098
      %v2131 = vadd.f32 %v2067, %v2099
      %v2132 = vadd.f32 %v2068, %v2100
      %v2133 = vadd.f32 %v2069, %v2101
      %v2134 = vadd.f32 %v2070, %v2102
      %v2135 = vadd.f32 %v2071, %v2103
      %v2136 = vadd.f32 %v2072, %v2104
      %v2137 = vadd.f32 %v2073, %v2105
      %v2138 = vadd.f32 %v2074, %v2106
      %v2139 = vadd.f32 %v2075, %v2107
      %v2140 = vadd.f32 %v2076, %v2108
      %v2141 = vadd.f32 %v2077, %v2109
      %v2142 = vadd.f32 %v2078, %v2110
      %v2143 = vadd.f32 %v2079, %v2111
      %v2144 = vadd.f32 %v2080, %v2112
      %v2145 = vadd.f32 %v2081, %v2113
      %v2146 = vadd.f32 %v2082, %v2114
      %v2147 = vadd.f32 %v2083, %v2115
      %v2148 = vadd.f32 %v2084, %v2116
      %v2149 = vadd.f32 %v2085, %v2117
      %v2150 = vadd.f32 %v2086, %v2118
      %v2151 = vadd.f32 %v2087, %v2119
      %v2152 = vadd.f32 %v2088, %v2120
      %v2153 = vadd.f32 %v2089, %v2121
      %2154 = vst [vmem:[%s328] sm:$0xff] %v2122
      %2155 = vst [vmem:[%s328 + $0x8] sm:$0xff] %v2123
      %2156 = vst [vmem:[%s328 + $0x10] sm:$0xff] %v2124
      %2157 = vst [vmem:[%s328 + $0x18] sm:$0xff] %v2125
      %2158 = vst [vmem:[%s328 + $0x20] sm:$0xff] %v2126
      %2159 = vst [vmem:[%s328 + $0x28] sm:$0xff] %v2127
      %2160 = vst [vmem:[%s328 + $0x30] sm:$0xff] %v2128
      %2161 = vst [vmem:[%s328 + $0x38] sm:$0xff] %v2129
      %2162 = vst [vmem:[%s328 + $0x40] sm:$0xff] %v2130
      %2163 = vst [vmem:[%s328 + $0x48] sm:$0xff] %v2131
      %2164 = vst [vmem:[%s328 + $0x50] sm:$0xff] %v2132
      %2165 = vst [vmem:[%s328 + $0x58] sm:$0xff] %v2133
      %2166 = vst [vmem:[%s328 + $0x60] sm:$0xff] %v2134
      %2167 = vst [vmem:[%s328 + $0x68] sm:$0xff] %v2135
      %2168 = vst [vmem:[%s328 + $0x70] sm:$0xff] %v2136
      %2169 = vst [vmem:[%s328 + $0x78] sm:$0xff] %v2137
      %2170 = vst [vmem:[%s328 + $0x80] sm:$0xff] %v2138
      %2171 = vst [vmem:[%s328 + $0x88] sm:$0xff] %v2139
      %2172 = vst [vmem:[%s328 + $0x90] sm:$0xff] %v2140
      %2173 = vst [vmem:[%s328 + $0x98] sm:$0xff] %v2141
      %2174 = vst [vmem:[%s328 + $0xa0] sm:$0xff] %v2142
      %2175 = vst [vmem:[%s328 + $0xa8] sm:$0xff] %v2143
      %2176 = vst [vmem:[%s328 + $0xb0] sm:$0xff] %v2144
      %2177 = vst [vmem:[%s328 + $0xb8] sm:$0xff] %v2145
      %2178 = vst [vmem:[%s328 + $0xc0] sm:$0xff] %v2146
      %2179 = vst [vmem:[%s328 + $0xc8] sm:$0xff] %v2147
      %2180 = vst [vmem:[%s328 + $0xd0] sm:$0xff] %v2148
      %2181 = vst [vmem:[%s328 + $0xd8] sm:$0xff] %v2149
      %2182 = vst [vmem:[%s328 + $0xe0] sm:$0xff] %v2150
      %2183 = vst [vmem:[%s328 + $0xe8] sm:$0xff] %v2151
      %2184 = vst [vmem:[%s328 + $0xf0] sm:$0xff] %v2152
      %2185 = vst [vmem:[%s328 + $0xf8] sm:$0xff] %v2153
      %s2186 = smul.u32 2, %s25
      %p2187 = scmp.lt.s32.totalorder %s24, 1
      %s2188 = scalar_select %p2187, %s24, 1
      %p2189 = scmp.lt.s32.totalorder %s2186, 1
      %s2190 = scalar_select %p2189, %s2186, 1
      %s2191 = smul.addr %s2188, 32
      %s2192 = sadd.s32 %s2190, %s2191
      %s2193 = smul.addr %s2192, 8
      %s2194 = scalar_lea.vmem %s8, %s2193
      // Predicated region
      $region57: #{self_attention.1} parent=51 // pred_check
        %p2195 = pneg %p225
      $region58: #{self_attention.1} parent=51 // pred_check_branch
        %2197 = sbr.rel (%p2195) target = $region60
      $region59: #{self_attention.1} parent=51 // pred_region
        %s2198 = smul.u32 2, %s25
      $region60: #{self_attention.1} parent=51 // pred_fallthru
        _
    $region52: #{self_attention.1} parent=5 // pred_fallthru
      _
    %p2199 = scmp.le.s32.totalorder 2, %s15
    // Predicated region
    $region61: #{self_attention.1} parent=5 // pred_check
      %p2200 = pneg %p2199
    $region62: #{self_attention.1} parent=5 // pred_check_branch
      %2202 = sbr.rel (%p2200) target = $region64
    $region63: #{self_attention.1} parent=5 // pred_region
      %s2203 = ssub.s32 %s15, 2
      // Predicated region
      $region65: #{self_attention.1} parent=63 // pred_check
        %p2204 = pneg %p231
      $region66: #{self_attention.1} parent=63 // pred_check_branch
        %2206 = sbr.rel (%p2204) target = $region68
      $region67: #{self_attention.1} parent=63 // pred_region
        %s2207 = smul.u32 2, %s27
        %p2208 = scmp.lt.s32.totalorder %s26, 1
        %s2209 = scalar_select %p2208, %s26, 1
        %p2210 = scmp.lt.s32.totalorder %s2207, 1
        %s2211 = scalar_select %p2210, %s2207, 1
        %s2212 = smul.addr %s2209, 32
        %s2213 = sadd.s32 %s2211, %s2212
        %s2214 = smul.addr %s2213, 8
        %s2215 = scalar_lea.vmem %s8, %s2214
      $region68: #{self_attention.1} parent=63 // pred_fallthru
        _
    $region64: #{self_attention.1} parent=5 // pred_fallthru
      _
  $region6: #{self_attention.1} parent=0 // loop_footer
    %s19 = sadd.s32 1, %s15
  $region7: #{self_attention.1} parent=0 // loop_footer_branch
    %14 = sbr.rel target = $region3
  $region8: #{self_attention.1} parent=0 // loop_exit
    _

</llo_original>
